<compile_context>
chip_gen: v5e
topology: v5e:2x2
jax: 0.10.0
libtpu: 0.0.40
codegen_flags: <defaults>
</compile_context>

<pallas_src>
import jax
import jax.numpy as jnp
from jax.experimental import pallas as pl
from jax.experimental.pallas import tpu as pltpu


def _autoencoder_kernel(x_ref,
                        w1_ref, b1_ref, w2_ref, b2_ref, w3_ref, b3_ref,
                        w4_ref, b4_ref, w5_ref, b5_ref, w6_ref, b6_ref,
                        o_ref):
    def linear(h, w_ref, b_ref):
        # bf16 operands feed the MXU; accumulate in f32; f32 bias add on VPU.
        return jnp.dot(h.astype(jnp.bfloat16), w_ref[...],
                       preferred_element_type=jnp.float32) + b_ref[...]

    x = x_ref[...]

    # Encoder: obs_size -> 256 -> 64 -> 20 (ReLU after each)
    h = jnp.maximum(linear(x, w1_ref, b1_ref), 0.0)
    h = jnp.maximum(linear(h, w2_ref, b2_ref), 0.0)
    h = jnp.maximum(linear(h, w3_ref, b3_ref), 0.0)      # code: (Bt, 20)

    # Decoder: 20 -> 64 -> 256 -> obs_size (ReLU, ReLU, Sigmoid)
    h = jnp.maximum(linear(h, w4_ref, b4_ref), 0.0)
    h = jnp.maximum(linear(h, w5_ref, b5_ref), 0.0)
    z = linear(h, w6_ref, b6_ref)

    o_ref[...] = jax.nn.sigmoid(z).astype(o_ref.dtype)


def _pick_block_b(B):
    """Batch tile: full batch if small, else the largest MXU-friendly divisor."""
    if B <= 512:
        return B
    for bt in (512, 256, 128, 64, 32, 16, 8):
        if B % bt == 0:
            return bt
    return B  # fallback: single block


def auto_encoder_forward(x_nchw, params, block_b=None):
    """x_nchw: (B, C, H, W) float32.  params: list of (W, b) pairs, W is (in, out)."""
    B = x_nchw.shape[0]
    x_flat = x_nchw.reshape(B, -1).astype(jnp.float32)   # == input.view(B, -1)
    obs_size = x_flat.shape[1]

    if block_b is None:
        block_b = _pick_block_b(B)
    assert B % block_b == 0, (B, block_b)
    grid = (B // block_b,)

    flat_params = []
    in_specs = [pl.BlockSpec((block_b, obs_size), lambda i: (i, 0))]
    for w, b in params:
        flat_params.append(w.astype(jnp.bfloat16))       # bf16 weights for MXU / DMA
        flat_params.append(b.astype(jnp.float32))
        # Constant index maps -> weights/biases DMA'd once, resident across grid steps.
        in_specs.append(pl.BlockSpec(w.shape, lambda i: (0, 0)))
        in_specs.append(pl.BlockSpec(b.shape, lambda i: (0, 0)))
    out_spec = pl.BlockSpec((block_b, obs_size), lambda i: (i, 0))

    # Advisory cost estimate for XLA's scheduler.
    dims = [w.shape for w, _ in params]
    flops = 2 * B * sum(fi * fo for fi, fo in dims)
    weight_bytes = sum(w.size * 2 + b.size * 4 for w, b in params)
    bytes_accessed = weight_bytes + 2 * B * obs_size * 4
    cost = pl.CostEstimate(flops=flops,
                           transcendentals=B * obs_size,
                           bytes_accessed=bytes_accessed)

    # VMEM budget: resident weights + double-buffered (Bt, obs) in/out tiles
    # + intermediates, with headroom.  Capped at 48 MiB (safe on v7x's 64 MiB).
    vmem_limit = int(min(max(weight_bytes + 6 * block_b * obs_size * 4 + (4 << 20),
                             16 << 20),
                         48 << 20))

    out = pl.pallas_call(
        _autoencoder_kernel,
        out_shape=jax.ShapeDtypeStruct((B, obs_size), jnp.float32),
        grid=grid,
        in_specs=in_specs,
        out_specs=out_spec,
        compiler_params=pltpu.CompilerParams(
            dimension_semantics=("parallel",),
            vmem_limit_bytes=vmem_limit),
        cost_estimate=cost,
    )(x_flat, *flat_params)
    return out


def init_params(key, obs_size):
    """Deterministic init of the 6 Linear layers (shapes from the module __init__)."""
    dims = [(obs_size, 256), (256, 64), (64, 20),      # Encoder
            (20, 64), (64, 256), (256, obs_size)]      # Decoder
    params = []
    for i, (fan_in, fan_out) in enumerate(dims):
        kw, kb, key = jax.random.split(jax.random.fold_in(key, i), 3)
        bound = 1.0 / jnp.sqrt(jnp.float32(fan_in))    # PyTorch default Linear init range
        w = jax.random.uniform(kw, (fan_in, fan_out), jnp.float32, -bound, bound)
        b = jax.random.uniform(kb, (1, fan_out), jnp.float32, -bound, bound)
        params.append((w, b))
    return params


def reference_forward(x_nchw, params):
    """Plain-JAX reference mirroring the kernel's precision choices (bf16 matmul, f32 acc)."""
    h = x_nchw.reshape(x_nchw.shape[0], -1).astype(jnp.float32)
    acts = [jax.nn.relu] * 5 + [jax.nn.sigmoid]
    for (w, b), act in zip(params, acts):
        z = jnp.dot(h.astype(jnp.bfloat16), w.astype(jnp.bfloat16),
                    preferred_element_type=jnp.float32) + b.astype(jnp.float32)
        h = act(z)
    return h


if __name__ == "__main__":
    key = jax.random.PRNGKey(0)
    B, C, H, W = 2, 4, 16, 16                 # obs_size = C*H*W = 1024
    obs_size = C * H * W

    kx, kp = jax.random.split(key)
    params = init_params(kp, obs_size)

    # Small-batch case (single grid step, block = full batch).
    x = jax.random.uniform(kx, (B, C, H, W), jnp.float32)
    out = jax.block_until_ready(auto_encoder_forward(x, params))
    ref = jax.block_until_ready(reference_forward(x, params))
    assert out.shape == (B, obs_size), out.shape
    assert jnp.allclose(out, ref, atol=2e-3, rtol=2e-3), \
        float(jnp.max(jnp.abs(out - ref)))

    # Larger batch exercising the pipelined grid (2 steps, weights resident).
    B2 = 256
    x2 = jax.random.uniform(jax.random.fold_in(kx, 1), (B2, C, H, W), jnp.float32)
    out2 = jax.block_until_ready(auto_encoder_forward(x2, params, block_b=128))
    ref2 = jax.block_until_ready(reference_forward(x2, params))
    assert out2.shape == (B2, obs_size), out2.shape
    assert jnp.allclose(out2, ref2, atol=2e-3, rtol=2e-3), \
        float(jnp.max(jnp.abs(out2 - ref2)))

    print("KERNEL_OK")
</pallas_src>

<mosaic_0001>
module attributes {stable_mosaic.version = 11 : i64} {
  func.func @_autoencoder_kernel(%arg0: i32, %arg1: memref<2x1024xf32, #tpu.memory_space<vmem>>, %arg2: memref<1024x256xbf16, #tpu.memory_space<vmem>>, %arg3: memref<1x256xf32, #tpu.memory_space<vmem>>, %arg4: memref<256x64xbf16, #tpu.memory_space<vmem>>, %arg5: memref<1x64xf32, #tpu.memory_space<vmem>>, %arg6: memref<64x20xbf16, #tpu.memory_space<vmem>>, %arg7: memref<1x20xf32, #tpu.memory_space<vmem>>, %arg8: memref<20x64xbf16, #tpu.memory_space<vmem>>, %arg9: memref<1x64xf32, #tpu.memory_space<vmem>>, %arg10: memref<64x256xbf16, #tpu.memory_space<vmem>>, %arg11: memref<1x256xf32, #tpu.memory_space<vmem>>, %arg12: memref<256x1024xbf16, #tpu.memory_space<vmem>>, %arg13: memref<1x1024xf32, #tpu.memory_space<vmem>>, %arg14: memref<2x1024xf32, #tpu.memory_space<vmem>>) attributes {dimension_semantics = [#tpu.dimension_semantics<parallel>], iteration_bounds = array<i64: 1>, scalar_prefetch = 0 : i64, scratch_operands = 0 : i64, tpu.core_type = #tpu.core_type<tc>, window_params = [{transform_indices = @transform_0, window_bounds = array<i64: 2, 1024>}, {pipeline_mode = #tpu.pipeline_mode<synchronous>, transform_indices = @transform_1, window_bounds = array<i64: 1024, 256>}, {pipeline_mode = #tpu.pipeline_mode<synchronous>, transform_indices = @transform_2, window_bounds = array<i64: 1, 256>}, {pipeline_mode = #tpu.pipeline_mode<synchronous>, transform_indices = @transform_3, window_bounds = array<i64: 256, 64>}, {pipeline_mode = #tpu.pipeline_mode<synchronous>, transform_indices = @transform_4, window_bounds = array<i64: 1, 64>}, {pipeline_mode = #tpu.pipeline_mode<synchronous>, transform_indices = @transform_5, window_bounds = array<i64: 64, 20>}, {pipeline_mode = #tpu.pipeline_mode<synchronous>, transform_indices = @transform_6, window_bounds = array<i64: 1, 20>}, {pipeline_mode = #tpu.pipeline_mode<synchronous>, transform_indices = @transform_7, window_bounds = array<i64: 20, 64>}, {pipeline_mode = #tpu.pipeline_mode<synchronous>, transform_indices = @transform_8, window_bounds = array<i64: 1, 64>}, {pipeline_mode = #tpu.pipeline_mode<synchronous>, transform_indices = @transform_9, window_bounds = array<i64: 64, 256>}, {pipeline_mode = #tpu.pipeline_mode<synchronous>, transform_indices = @transform_10, window_bounds = array<i64: 1, 256>}, {pipeline_mode = #tpu.pipeline_mode<synchronous>, transform_indices = @transform_11, window_bounds = array<i64: 256, 1024>}, {pipeline_mode = #tpu.pipeline_mode<synchronous>, transform_indices = @transform_12, window_bounds = array<i64: 1, 1024>}, {transform_indices = @transform_13, window_bounds = array<i64: 2, 1024>}]} {
    %c0 = arith.constant 0 : index
    %c0_0 = arith.constant 0 : index
    %0 = vector.load %arg1[%c0, %c0_0] : memref<2x1024xf32, #tpu.memory_space<vmem>>, vector<2x1024xf32>
    %1 = arith.truncf %0 : vector<2x1024xf32> to vector<2x1024xbf16>
    %c0_1 = arith.constant 0 : index
    %c0_2 = arith.constant 0 : index
    %2 = vector.load %arg2[%c0_1, %c0_2] : memref<1024x256xbf16, #tpu.memory_space<vmem>>, vector<1024x256xbf16>
    %cst = arith.constant dense<0.000000e+00> : vector<2x256xf32>
    %3 = tpu.matmul %1, %2, %cst {dimension_numbers = #tpu.dot_dimension_numbers<[1], [0], [0], [1], [0, 0, 1, 1], [], []>} : vector<2x1024xbf16>, vector<1024x256xbf16>, vector<2x256xf32> -> vector<2x256xf32>
    %c0_3 = arith.constant 0 : index
    %c0_4 = arith.constant 0 : index
    %4 = vector.load %arg3[%c0_3, %c0_4] : memref<1x256xf32, #tpu.memory_space<vmem>>, vector<1x256xf32>
    %5 = vector.broadcast %4 : vector<1x256xf32> to vector<2x256xf32>
    %6 = arith.addf %3, %5 : vector<2x256xf32>
    %cst_5 = arith.constant 0.000000e+00 : f32
    %7 = vector.broadcast %cst_5 : f32 to vector<2x256xf32>
    %8 = arith.maximumf %6, %7 : vector<2x256xf32>
    %9 = arith.truncf %8 : vector<2x256xf32> to vector<2x256xbf16>
    %c0_6 = arith.constant 0 : index
    %c0_7 = arith.constant 0 : index
    %10 = vector.load %arg4[%c0_6, %c0_7] : memref<256x64xbf16, #tpu.memory_space<vmem>>, vector<256x64xbf16>
    %cst_8 = arith.constant dense<0.000000e+00> : vector<2x64xf32>
    %11 = tpu.matmul %9, %10, %cst_8 {dimension_numbers = #tpu.dot_dimension_numbers<[1], [0], [0], [1], [0, 0, 1, 1], [], []>} : vector<2x256xbf16>, vector<256x64xbf16>, vector<2x64xf32> -> vector<2x64xf32>
    %c0_9 = arith.constant 0 : index
    %c0_10 = arith.constant 0 : index
    %12 = vector.load %arg5[%c0_9, %c0_10] : memref<1x64xf32, #tpu.memory_space<vmem>>, vector<1x64xf32>
    %13 = vector.broadcast %12 : vector<1x64xf32> to vector<2x64xf32>
    %14 = arith.addf %11, %13 : vector<2x64xf32>
    %cst_11 = arith.constant 0.000000e+00 : f32
    %15 = vector.broadcast %cst_11 : f32 to vector<2x64xf32>
    %16 = arith.maximumf %14, %15 : vector<2x64xf32>
    %17 = arith.truncf %16 : vector<2x64xf32> to vector<2x64xbf16>
    %c0_12 = arith.constant 0 : index
    %c0_13 = arith.constant 0 : index
    %18 = vector.load %arg6[%c0_12, %c0_13] : memref<64x20xbf16, #tpu.memory_space<vmem>>, vector<64x20xbf16>
    %cst_14 = arith.constant dense<0.000000e+00> : vector<2x20xf32>
    %19 = tpu.matmul %17, %18, %cst_14 {dimension_numbers = #tpu.dot_dimension_numbers<[1], [0], [0], [1], [0, 0, 1, 1], [], []>} : vector<2x64xbf16>, vector<64x20xbf16>, vector<2x20xf32> -> vector<2x20xf32>
    %c0_15 = arith.constant 0 : index
    %c0_16 = arith.constant 0 : index
    %20 = vector.load %arg7[%c0_15, %c0_16] : memref<1x20xf32, #tpu.memory_space<vmem>>, vector<1x20xf32>
    %21 = vector.broadcast %20 : vector<1x20xf32> to vector<2x20xf32>
    %22 = arith.addf %19, %21 : vector<2x20xf32>
    %cst_17 = arith.constant 0.000000e+00 : f32
    %23 = vector.broadcast %cst_17 : f32 to vector<2x20xf32>
    %24 = arith.maximumf %22, %23 : vector<2x20xf32>
    %25 = arith.truncf %24 : vector<2x20xf32> to vector<2x20xbf16>
    %c0_18 = arith.constant 0 : index
    %c0_19 = arith.constant 0 : index
    %26 = vector.load %arg8[%c0_18, %c0_19] : memref<20x64xbf16, #tpu.memory_space<vmem>>, vector<20x64xbf16>
    %cst_20 = arith.constant dense<0.000000e+00> : vector<2x64xf32>
    %27 = tpu.matmul %25, %26, %cst_20 {dimension_numbers = #tpu.dot_dimension_numbers<[1], [0], [0], [1], [0, 0, 1, 1], [], []>} : vector<2x20xbf16>, vector<20x64xbf16>, vector<2x64xf32> -> vector<2x64xf32>
    %c0_21 = arith.constant 0 : index
    %c0_22 = arith.constant 0 : index
    %28 = vector.load %arg9[%c0_21, %c0_22] : memref<1x64xf32, #tpu.memory_space<vmem>>, vector<1x64xf32>
    %29 = vector.broadcast %28 : vector<1x64xf32> to vector<2x64xf32>
    %30 = arith.addf %27, %29 : vector<2x64xf32>
    %cst_23 = arith.constant 0.000000e+00 : f32
    %31 = vector.broadcast %cst_23 : f32 to vector<2x64xf32>
    %32 = arith.maximumf %30, %31 : vector<2x64xf32>
    %33 = arith.truncf %32 : vector<2x64xf32> to vector<2x64xbf16>
    %c0_24 = arith.constant 0 : index
    %c0_25 = arith.constant 0 : index
    %34 = vector.load %arg10[%c0_24, %c0_25] : memref<64x256xbf16, #tpu.memory_space<vmem>>, vector<64x256xbf16>
    %cst_26 = arith.constant dense<0.000000e+00> : vector<2x256xf32>
    %35 = tpu.matmul %33, %34, %cst_26 {dimension_numbers = #tpu.dot_dimension_numbers<[1], [0], [0], [1], [0, 0, 1, 1], [], []>} : vector<2x64xbf16>, vector<64x256xbf16>, vector<2x256xf32> -> vector<2x256xf32>
    %c0_27 = arith.constant 0 : index
    %c0_28 = arith.constant 0 : index
    %36 = vector.load %arg11[%c0_27, %c0_28] : memref<1x256xf32, #tpu.memory_space<vmem>>, vector<1x256xf32>
    %37 = vector.broadcast %36 : vector<1x256xf32> to vector<2x256xf32>
    %38 = arith.addf %35, %37 : vector<2x256xf32>
    %cst_29 = arith.constant 0.000000e+00 : f32
    %39 = vector.broadcast %cst_29 : f32 to vector<2x256xf32>
    %40 = arith.maximumf %38, %39 : vector<2x256xf32>
    %41 = arith.truncf %40 : vector<2x256xf32> to vector<2x256xbf16>
    %c0_30 = arith.constant 0 : index
    %c0_31 = arith.constant 0 : index
    %42 = vector.load %arg12[%c0_30, %c0_31] : memref<256x1024xbf16, #tpu.memory_space<vmem>>, vector<256x1024xbf16>
    %cst_32 = arith.constant dense<0.000000e+00> : vector<2x1024xf32>
    %43 = tpu.matmul %41, %42, %cst_32 {dimension_numbers = #tpu.dot_dimension_numbers<[1], [0], [0], [1], [0, 0, 1, 1], [], []>} : vector<2x256xbf16>, vector<256x1024xbf16>, vector<2x1024xf32> -> vector<2x1024xf32>
    %c0_33 = arith.constant 0 : index
    %c0_34 = arith.constant 0 : index
    %44 = vector.load %arg13[%c0_33, %c0_34] : memref<1x1024xf32, #tpu.memory_space<vmem>>, vector<1x1024xf32>
    %45 = vector.broadcast %44 : vector<1x1024xf32> to vector<2x1024xf32>
    %46 = arith.addf %43, %45 : vector<2x1024xf32>
    %47 = arith.negf %46 : vector<2x1024xf32>
    %48 = math.exp %47 : vector<2x1024xf32>
    %cst_35 = arith.constant 1.000000e+00 : f32
    %49 = vector.broadcast %cst_35 : f32 to vector<2x1024xf32>
    %50 = arith.addf %49, %48 : vector<2x1024xf32>
    %51 = arith.divf %49, %50 : vector<2x1024xf32>
    %c0_36 = arith.constant 0 : index
    %c0_37 = arith.constant 0 : index
    %52 = vector.load %arg14[%c0_36, %c0_37] : memref<2x1024xf32, #tpu.memory_space<vmem>>, vector<2x1024xf32>
    tpu.vector_store %arg14[%c0_36, %c0_37], %51 {strides = array<i32>} : memref<2x1024xf32, #tpu.memory_space<vmem>>, vector<2x1024xf32>,
    return
  }
  func.func @transform_0(%arg0: i32) -> (i32, i32) {
    %c0_i32 = arith.constant 0 : i32
    %c0_i32_0 = arith.constant 0 : i32
    return %arg0, %c0_i32 : i32, i32
  }
  func.func @transform_1(%arg0: i32) -> (i32, i32) {
    %c0_i32 = arith.constant 0 : i32
    %c0_i32_0 = arith.constant 0 : i32
    %c0_i32_1 = arith.constant 0 : i32
    return %c0_i32, %c0_i32_0 : i32, i32
  }
  func.func @transform_2(%arg0: i32) -> (i32, i32) {
    %c0_i32 = arith.constant 0 : i32
    %c0_i32_0 = arith.constant 0 : i32
    %c0_i32_1 = arith.constant 0 : i32
    return %c0_i32, %c0_i32_0 : i32, i32
  }
  func.func @transform_3(%arg0: i32) -> (i32, i32) {
    %c0_i32 = arith.constant 0 : i32
    %c0_i32_0 = arith.constant 0 : i32
    %c0_i32_1 = arith.constant 0 : i32
    return %c0_i32, %c0_i32_0 : i32, i32
  }
  func.func @transform_4(%arg0: i32) -> (i32, i32) {
    %c0_i32 = arith.constant 0 : i32
    %c0_i32_0 = arith.constant 0 : i32
    %c0_i32_1 = arith.constant 0 : i32
    return %c0_i32, %c0_i32_0 : i32, i32
  }
  func.func @transform_5(%arg0: i32) -> (i32, i32) {
    %c0_i32 = arith.constant 0 : i32
    %c0_i32_0 = arith.constant 0 : i32
    %c0_i32_1 = arith.constant 0 : i32
    return %c0_i32, %c0_i32_0 : i32, i32
  }
  func.func @transform_6(%arg0: i32) -> (i32, i32) {
    %c0_i32 = arith.constant 0 : i32
    %c0_i32_0 = arith.constant 0 : i32
    %c0_i32_1 = arith.constant 0 : i32
    return %c0_i32, %c0_i32_0 : i32, i32
  }
  func.func @transform_7(%arg0: i32) -> (i32, i32) {
    %c0_i32 = arith.constant 0 : i32
    %c0_i32_0 = arith.constant 0 : i32
    %c0_i32_1 = arith.constant 0 : i32
    return %c0_i32, %c0_i32_0 : i32, i32
  }
  func.func @transform_8(%arg0: i32) -> (i32, i32) {
    %c0_i32 = arith.constant 0 : i32
    %c0_i32_0 = arith.constant 0 : i32
    %c0_i32_1 = arith.constant 0 : i32
    return %c0_i32, %c0_i32_0 : i32, i32
  }
  func.func @transform_9(%arg0: i32) -> (i32, i32) {
    %c0_i32 = arith.constant 0 : i32
    %c0_i32_0 = arith.constant 0 : i32
    %c0_i32_1 = arith.constant 0 : i32
    return %c0_i32, %c0_i32_0 : i32, i32
  }
  func.func @transform_10(%arg0: i32) -> (i32, i32) {
    %c0_i32 = arith.constant 0 : i32
    %c0_i32_0 = arith.constant 0 : i32
    %c0_i32_1 = arith.constant 0 : i32
    return %c0_i32, %c0_i32_0 : i32, i32
  }
  func.func @transform_11(%arg0: i32) -> (i32, i32) {
    %c0_i32 = arith.constant 0 : i32
    %c0_i32_0 = arith.constant 0 : i32
    %c0_i32_1 = arith.constant 0 : i32
    return %c0_i32, %c0_i32_0 : i32, i32
  }
  func.func @transform_12(%arg0: i32) -> (i32, i32) {
    %c0_i32 = arith.constant 0 : i32
    %c0_i32_0 = arith.constant 0 : i32
    %c0_i32_1 = arith.constant 0 : i32
    return %c0_i32, %c0_i32_0 : i32, i32
  }
  func.func @transform_13(%arg0: i32) -> (i32, i32) {
    %c0_i32 = arith.constant 0 : i32
    %c0_i32_0 = arith.constant 0 : i32
    return %arg0, %c0_i32 : i32, i32
  }
}

</mosaic_0001>

<llo_original>
// kernel: tpu_custom_call.1
$region0: #{tpu_custom_call.1}
  #allocation0 [shape = 'u32[]', space=smem, size = 0x4, offset = 0x4, fixed_abs, tag = 'smem constant byte address 0x4 - core index']
  #allocation1 [shape = 'u32[72,128]{1,0:T(1,128)}', space=vmem, size = 0x9000, scoped, tag = 'internal scratch']
  %s0 = inlined_call_operand.vmem [shape: f32[2,1024], index: 0, kind: input, shape index: {}]
  %s1 = inlined_call_operand.hbm [shape: bf16[1024,256], index: 1, kind: input, shape index: {}]
  %s2 = inlined_call_operand.vmem [shape: f32[1,256], index: 2, kind: input, shape index: {}]
  %s3 = inlined_call_operand.vmem [shape: bf16[256,64], index: 3, kind: input, shape index: {}]
  %s4 = inlined_call_operand.vmem [shape: f32[1,64], index: 4, kind: input, shape index: {}]
  %s5 = inlined_call_operand.vmem [shape: bf16[64,20], index: 5, kind: input, shape index: {}]
  %s6 = inlined_call_operand.vmem [shape: f32[1,20], index: 6, kind: input, shape index: {}]
  %s7 = inlined_call_operand.vmem [shape: bf16[20,64], index: 7, kind: input, shape index: {}]
  %s8 = inlined_call_operand.vmem [shape: f32[1,64], index: 8, kind: input, shape index: {}]
  %s9 = inlined_call_operand.vmem [shape: bf16[64,256], index: 9, kind: input, shape index: {}]
  %s10 = inlined_call_operand.vmem [shape: f32[1,256], index: 10, kind: input, shape index: {}]
  %s11 = inlined_call_operand.hbm [shape: bf16[256,1024], index: 11, kind: input, shape index: {}]
  %s12 = inlined_call_operand.vmem [shape: f32[1,1024], index: 12, kind: input, shape index: {}]
  %s13 = inlined_call_operand.hbm [shape: f32[2,1024], index: 13, kind: output, shape index: {}]
  %s14 = sld [smem:[#allocation0]]
  $region70: #{tpu_custom_call.1} parent=0
    _
  %s16 = ssub.s32 1, %s14
  %s17 = scalar_select 0, %s16, %s14
  $region1: #{tpu_custom_call.1} parent=0
    #allocation2 [shape = 'u8[524288]{0}', space=vmem, size = 0x80000, scoped, tag = 'input window, operand 1, single buffered']
    #allocation3 [shape = 's32[1]{0}', space=sflag, size = 0x4, scoped, tag = 'scoped memory for tpu_custom_call.1']
    #allocation4 [shape = 's32[1]{0}', space=sflag, size = 0x4, scoped, tag = 'scoped memory for tpu_custom_call.1']
    #allocation5 [shape = 'u8[524288]{0}', space=vmem, size = 0x80000, scoped, tag = 'input window, operand 11, single buffered']
    #allocation6 [shape = 's32[1]{0}', space=sflag, size = 0x4, scoped, tag = 'scoped memory for tpu_custom_call.1']
    #allocation7 [shape = 'u8[8192]{0}', space=vmem, size = 0x2000, scoped, tag = 'output window, operand 0, single buffered']
    %18 = vsyncpa [#allocation3], 0
    %19 = vsyncpa [#allocation6], 0
    %20 = vsyncpa [#allocation4], 0
    // Predicated region
    $region2: #{tpu_custom_call.1} parent=1 // pred_check
      _
    $region3: #{tpu_custom_call.1} parent=1 // pred_check_branch
      %22 = sbr.rel (0) target = $region5
    $region4: #{tpu_custom_call.1} parent=1 // pred_region
      _
    $region5: #{tpu_custom_call.1} parent=1 // pred_fallthru
      _
    // Predicated region
    $region6: #{tpu_custom_call.1} parent=1 // pred_check
      _
    $region7: #{tpu_custom_call.1} parent=1 // pred_check_branch
      %24 = sbr.rel (0) target = $region9
    $region8: #{tpu_custom_call.1} parent=1 // pred_region
      %26 = vsyncadd [#allocation3], 0
      %s27 = sshll.u32 %s1, 4
      %s28 = int_to_ptr.hbm [resolvable:$true] %s27
      %s29 = sshll.u32 [#allocation2], 4
      %s30 = int_to_ptr.vmem [resolvable:$true] %s29
      %35 = dma.hbm_to_vmem [thread:$0]  %s28, 16384, %s30, [#allocation3], 128, 128, 8
    $region9: #{tpu_custom_call.1} parent=1 // pred_fallthru
      _
    // Predicated region
    $region10: #{tpu_custom_call.1} parent=1 // pred_check
      _
    $region11: #{tpu_custom_call.1} parent=1 // pred_check_branch
      %37 = sbr.rel (0) target = $region13
    $region12: #{tpu_custom_call.1} parent=1 // pred_region
      _
    $region13: #{tpu_custom_call.1} parent=1 // pred_fallthru
      _
    // Predicated region
    $region14: #{tpu_custom_call.1} parent=1 // pred_check
      _
    $region15: #{tpu_custom_call.1} parent=1 // pred_check_branch
      %39 = sbr.rel (0) target = $region17
    $region16: #{tpu_custom_call.1} parent=1 // pred_region
      _
    $region17: #{tpu_custom_call.1} parent=1 // pred_fallthru
      _
    // Predicated region
    $region18: #{tpu_custom_call.1} parent=1 // pred_check
      _
    $region19: #{tpu_custom_call.1} parent=1 // pred_check_branch
      %41 = sbr.rel (0) target = $region21
    $region20: #{tpu_custom_call.1} parent=1 // pred_region
      _
    $region21: #{tpu_custom_call.1} parent=1 // pred_fallthru
      _
    // Predicated region
    $region22: #{tpu_custom_call.1} parent=1 // pred_check
      _
    $region23: #{tpu_custom_call.1} parent=1 // pred_check_branch
      %43 = sbr.rel (0) target = $region25
    $region24: #{tpu_custom_call.1} parent=1 // pred_region
      _
    $region25: #{tpu_custom_call.1} parent=1 // pred_fallthru
      _
    // Predicated region
    $region26: #{tpu_custom_call.1} parent=1 // pred_check
      _
    $region27: #{tpu_custom_call.1} parent=1 // pred_check_branch
      %45 = sbr.rel (0) target = $region29
    $region28: #{tpu_custom_call.1} parent=1 // pred_region
      _
    $region29: #{tpu_custom_call.1} parent=1 // pred_fallthru
      _
    // Predicated region
    $region30: #{tpu_custom_call.1} parent=1 // pred_check
      _
    $region31: #{tpu_custom_call.1} parent=1 // pred_check_branch
      %47 = sbr.rel (0) target = $region33
    $region32: #{tpu_custom_call.1} parent=1 // pred_region
      _
    $region33: #{tpu_custom_call.1} parent=1 // pred_fallthru
      _
    // Predicated region
    $region34: #{tpu_custom_call.1} parent=1 // pred_check
      _
    $region35: #{tpu_custom_call.1} parent=1 // pred_check_branch
      %49 = sbr.rel (0) target = $region37
    $region36: #{tpu_custom_call.1} parent=1 // pred_region
      _
    $region37: #{tpu_custom_call.1} parent=1 // pred_fallthru
      _
    // Predicated region
    $region38: #{tpu_custom_call.1} parent=1 // pred_check
      _
    $region39: #{tpu_custom_call.1} parent=1 // pred_check_branch
      %51 = sbr.rel (0) target = $region41
    $region40: #{tpu_custom_call.1} parent=1 // pred_region
      _
    $region41: #{tpu_custom_call.1} parent=1 // pred_fallthru
      _
    // Predicated region
    $region42: #{tpu_custom_call.1} parent=1 // pred_check
      _
    $region43: #{tpu_custom_call.1} parent=1 // pred_check_branch
      %53 = sbr.rel (0) target = $region45
    $region44: #{tpu_custom_call.1} parent=1 // pred_region
      _
    $region45: #{tpu_custom_call.1} parent=1 // pred_fallthru
      _
    // Predicated region
    $region46: #{tpu_custom_call.1} parent=1 // pred_check
      _
    $region47: #{tpu_custom_call.1} parent=1 // pred_check_branch
      %55 = sbr.rel (0) target = $region49
    $region48: #{tpu_custom_call.1} parent=1 // pred_region
      %57 = vsyncadd [#allocation6], 0
      %s58 = sshll.u32 %s11, 4
      %s59 = int_to_ptr.hbm [resolvable:$true] %s58
      %s60 = sshll.u32 [#allocation5], 4
      %s61 = int_to_ptr.vmem [resolvable:$true] %s60
      %66 = dma.hbm_to_vmem [thread:$0]  %s59, 16384, %s61, [#allocation6], 512, 512, 32
    $region49: #{tpu_custom_call.1} parent=1 // pred_fallthru
      _
    // Predicated region
    $region50: #{tpu_custom_call.1} parent=1 // pred_check
      _
    $region51: #{tpu_custom_call.1} parent=1 // pred_check_branch
      %68 = sbr.rel (0) target = $region53
    $region52: #{tpu_custom_call.1} parent=1 // pred_region
      _
    $region53: #{tpu_custom_call.1} parent=1 // pred_fallthru
      _
    // Predicated region
    $region54: #{tpu_custom_call.1} parent=1 // pred_check
      _
    $region55: #{tpu_custom_call.1} parent=1 // pred_check_branch
      %70 = sbr.rel (0) target = $region57
    $region56: #{tpu_custom_call.1} parent=1 // pred_region
      %72 = dma.done [#allocation3], 16384
    $region57: #{tpu_custom_call.1} parent=1 // pred_fallthru
      _
    // Predicated region
    $region58: #{tpu_custom_call.1} parent=1 // pred_check
      _
    $region59: #{tpu_custom_call.1} parent=1 // pred_check_branch
      %74 = sbr.rel (0) target = $region61
    $region60: #{tpu_custom_call.1} parent=1 // pred_region
      %76 = dma.done [#allocation6], 16384
    $region61: #{tpu_custom_call.1} parent=1 // pred_fallthru
      _
    %v78 = vld [vmem:[%s0] sm:$0xff]
    %v79 = vld [vmem:[%s0 + $0x8] sm:$0xff]
    %82 = vst [vmem:[#allocation1] ss:$4 sm:$0xff] %v78
    %s83 = scalar_lea.vmem [#allocation1], 32
    %84 = vst [vmem:[%s83] ss:$4 sm:$0xff] %v79
    %v85 = vld.sshfl [vmem:[#allocation1] sm:$0xff pattern:$0x73625140]
    %v86 = vld.sshfl [vmem:[#allocation1 + $0x8] sm:$0xff pattern:$0x73625140]
    %v87 = vld.sshfl [vmem:[#allocation1 + $0x10] sm:$0xff pattern:$0x73625140]
    %v88 = vld.sshfl [vmem:[#allocation1 + $0x18] sm:$0xff pattern:$0x73625140]
    %v89 = vld.sshfl [vmem:[#allocation1 + $0x20] sm:$0xff pattern:$0x73625140]
    %v90 = vld.sshfl [vmem:[#allocation1 + $0x28] sm:$0xff pattern:$0x73625140]
    %v91 = vld.sshfl [vmem:[#allocation1 + $0x30] sm:$0xff pattern:$0x73625140]
    %v92 = vld.sshfl [vmem:[#allocation1 + $0x38] sm:$0xff pattern:$0x73625140]
    %v101 = vpack.c.bf16 %v85, %v85
    %v102 = vpack.c.bf16 %v86, %v86
    %v103 = vpack.c.bf16 %v87, %v87
    %v104 = vpack.c.bf16 %v88, %v88
    %v105 = vpack.c.bf16 %v89, %v89
    %v106 = vpack.c.bf16 %v90, %v90
    %v107 = vpack.c.bf16 %v91, %v91
    %v108 = vpack.c.bf16 %v92, %v92
    %v109 = vld [vmem:[#allocation2] sm:$0xff]
    %v110 = vld [vmem:[#allocation2 + $0x8] sm:$0xff]
    %v111 = vld [vmem:[#allocation2 + $0x10] sm:$0xff]
    %v112 = vld [vmem:[#allocation2 + $0x18] sm:$0xff]
    %v113 = vld [vmem:[#allocation2 + $0x20] sm:$0xff]
    %v114 = vld [vmem:[#allocation2 + $0x28] sm:$0xff]
    %v115 = vld [vmem:[#allocation2 + $0x30] sm:$0xff]
    %v116 = vld [vmem:[#allocation2 + $0x38] sm:$0xff]
    %v117 = vld [vmem:[#allocation2 + $0x40] sm:$0xff]
    %v118 = vld [vmem:[#allocation2 + $0x48] sm:$0xff]
    %v119 = vld [vmem:[#allocation2 + $0x50] sm:$0xff]
    %v120 = vld [vmem:[#allocation2 + $0x58] sm:$0xff]
    %v121 = vld [vmem:[#allocation2 + $0x60] sm:$0xff]
    %v122 = vld [vmem:[#allocation2 + $0x68] sm:$0xff]
    %v123 = vld [vmem:[#allocation2 + $0x70] sm:$0xff]
    %v124 = vld [vmem:[#allocation2 + $0x78] sm:$0xff]
    %v125 = vld [vmem:[#allocation2 + $0x80] sm:$0xff]
    %v126 = vld [vmem:[#allocation2 + $0x88] sm:$0xff]
    %v127 = vld [vmem:[#allocation2 + $0x90] sm:$0xff]
    %v128 = vld [vmem:[#allocation2 + $0x98] sm:$0xff]
    %v129 = vld [vmem:[#allocation2 + $0xa0] sm:$0xff]
    %v130 = vld [vmem:[#allocation2 + $0xa8] sm:$0xff]
    %v131 = vld [vmem:[#allocation2 + $0xb0] sm:$0xff]
    %v132 = vld [vmem:[#allocation2 + $0xb8] sm:$0xff]
    %v133 = vld [vmem:[#allocation2 + $0xc0] sm:$0xff]
    %v134 = vld [vmem:[#allocation2 + $0xc8] sm:$0xff]
    %v135 = vld [vmem:[#allocation2 + $0xd0] sm:$0xff]
    %v136 = vld [vmem:[#allocation2 + $0xd8] sm:$0xff]
    %v137 = vld [vmem:[#allocation2 + $0xe0] sm:$0xff]
    %v138 = vld [vmem:[#allocation2 + $0xe8] sm:$0xff]
    %v139 = vld [vmem:[#allocation2 + $0xf0] sm:$0xff]
    %v140 = vld [vmem:[#allocation2 + $0xf8] sm:$0xff]
    %v141 = vld [vmem:[#allocation2 + $0x100] sm:$0xff]
    %v142 = vld [vmem:[#allocation2 + $0x108] sm:$0xff]
    %v143 = vld [vmem:[#allocation2 + $0x110] sm:$0xff]
    %v144 = vld [vmem:[#allocation2 + $0x118] sm:$0xff]
    %v145 = vld [vmem:[#allocation2 + $0x120] sm:$0xff]
    %v146 = vld [vmem:[#allocation2 + $0x128] sm:$0xff]
    %v147 = vld [vmem:[#allocation2 + $0x130] sm:$0xff]
    %v148 = vld [vmem:[#allocation2 + $0x138] sm:$0xff]
    %v149 = vld [vmem:[#allocation2 + $0x140] sm:$0xff]
    %v150 = vld [vmem:[#allocation2 + $0x148] sm:$0xff]
    %v151 = vld [vmem:[#allocation2 + $0x150] sm:$0xff]
    %v152 = vld [vmem:[#allocation2 + $0x158] sm:$0xff]
    %v153 = vld [vmem:[#allocation2 + $0x160] sm:$0xff]
    %v154 = vld [vmem:[#allocation2 + $0x168] sm:$0xff]
    %v155 = vld [vmem:[#allocation2 + $0x170] sm:$0xff]
    %v156 = vld [vmem:[#allocation2 + $0x178] sm:$0xff]
    %v157 = vld [vmem:[#allocation2 + $0x180] sm:$0xff]
    %v158 = vld [vmem:[#allocation2 + $0x188] sm:$0xff]
    %v159 = vld [vmem:[#allocation2 + $0x190] sm:$0xff]
    %v160 = vld [vmem:[#allocation2 + $0x198] sm:$0xff]
    %v161 = vld [vmem:[#allocation2 + $0x1a0] sm:$0xff]
    %v162 = vld [vmem:[#allocation2 + $0x1a8] sm:$0xff]
    %v163 = vld [vmem:[#allocation2 + $0x1b0] sm:$0xff]
    %v164 = vld [vmem:[#allocation2 + $0x1b8] sm:$0xff]
    %v165 = vld [vmem:[#allocation2 + $0x1c0] sm:$0xff]
    %v166 = vld [vmem:[#allocation2 + $0x1c8] sm:$0xff]
    %v167 = vld [vmem:[#allocation2 + $0x1d0] sm:$0xff]
    %v168 = vld [vmem:[#allocation2 + $0x1d8] sm:$0xff]
    %v169 = vld [vmem:[#allocation2 + $0x1e0] sm:$0xff]
    %v170 = vld [vmem:[#allocation2 + $0x1e8] sm:$0xff]
    %v171 = vld [vmem:[#allocation2 + $0x1f0] sm:$0xff]
    %v172 = vld [vmem:[#allocation2 + $0x1f8] sm:$0xff]
    %v173 = vld [vmem:[#allocation2 + $0x200] sm:$0xff]
    %v174 = vld [vmem:[#allocation2 + $0x208] sm:$0xff]
    %v175 = vld [vmem:[#allocation2 + $0x210] sm:$0xff]
    %v176 = vld [vmem:[#allocation2 + $0x218] sm:$0xff]
    %v177 = vld [vmem:[#allocation2 + $0x220] sm:$0xff]
    %v178 = vld [vmem:[#allocation2 + $0x228] sm:$0xff]
    %v179 = vld [vmem:[#allocation2 + $0x230] sm:$0xff]
    %v180 = vld [vmem:[#allocation2 + $0x238] sm:$0xff]
    %v181 = vld [vmem:[#allocation2 + $0x240] sm:$0xff]
    %v182 = vld [vmem:[#allocation2 + $0x248] sm:$0xff]
    %v183 = vld [vmem:[#allocation2 + $0x250] sm:$0xff]
    %v184 = vld [vmem:[#allocation2 + $0x258] sm:$0xff]
    %v185 = vld [vmem:[#allocation2 + $0x260] sm:$0xff]
    %v186 = vld [vmem:[#allocation2 + $0x268] sm:$0xff]
    %v187 = vld [vmem:[#allocation2 + $0x270] sm:$0xff]
    %v188 = vld [vmem:[#allocation2 + $0x278] sm:$0xff]
    %v189 = vld [vmem:[#allocation2 + $0x280] sm:$0xff]
    %v190 = vld [vmem:[#allocation2 + $0x288] sm:$0xff]
    %v191 = vld [vmem:[#allocation2 + $0x290] sm:$0xff]
    %v192 = vld [vmem:[#allocation2 + $0x298] sm:$0xff]
    %v193 = vld [vmem:[#allocation2 + $0x2a0] sm:$0xff]
    %v194 = vld [vmem:[#allocation2 + $0x2a8] sm:$0xff]
    %v195 = vld [vmem:[#allocation2 + $0x2b0] sm:$0xff]
    %v196 = vld [vmem:[#allocation2 + $0x2b8] sm:$0xff]
    %v197 = vld [vmem:[#allocation2 + $0x2c0] sm:$0xff]
    %v198 = vld [vmem:[#allocation2 + $0x2c8] sm:$0xff]
    %v199 = vld [vmem:[#allocation2 + $0x2d0] sm:$0xff]
    %v200 = vld [vmem:[#allocation2 + $0x2d8] sm:$0xff]
    %v201 = vld [vmem:[#allocation2 + $0x2e0] sm:$0xff]
    %v202 = vld [vmem:[#allocation2 + $0x2e8] sm:$0xff]
    %v203 = vld [vmem:[#allocation2 + $0x2f0] sm:$0xff]
    %v204 = vld [vmem:[#allocation2 + $0x2f8] sm:$0xff]
    %v205 = vld [vmem:[#allocation2 + $0x300] sm:$0xff]
    %v206 = vld [vmem:[#allocation2 + $0x308] sm:$0xff]
    %v207 = vld [vmem:[#allocation2 + $0x310] sm:$0xff]
    %v208 = vld [vmem:[#allocation2 + $0x318] sm:$0xff]
    %v209 = vld [vmem:[#allocation2 + $0x320] sm:$0xff]
    %v210 = vld [vmem:[#allocation2 + $0x328] sm:$0xff]
    %v211 = vld [vmem:[#allocation2 + $0x330] sm:$0xff]
    %v212 = vld [vmem:[#allocation2 + $0x338] sm:$0xff]
    %v213 = vld [vmem:[#allocation2 + $0x340] sm:$0xff]
    %v214 = vld [vmem:[#allocation2 + $0x348] sm:$0xff]
    %v215 = vld [vmem:[#allocation2 + $0x350] sm:$0xff]
    %v216 = vld [vmem:[#allocation2 + $0x358] sm:$0xff]
    %v217 = vld [vmem:[#allocation2 + $0x360] sm:$0xff]
    %v218 = vld [vmem:[#allocation2 + $0x368] sm:$0xff]
    %v219 = vld [vmem:[#allocation2 + $0x370] sm:$0xff]
    %v220 = vld [vmem:[#allocation2 + $0x378] sm:$0xff]
    %v221 = vld [vmem:[#allocation2 + $0x380] sm:$0xff]
    %v222 = vld [vmem:[#allocation2 + $0x388] sm:$0xff]
    %v223 = vld [vmem:[#allocation2 + $0x390] sm:$0xff]
    %v224 = vld [vmem:[#allocation2 + $0x398] sm:$0xff]
    %v225 = vld [vmem:[#allocation2 + $0x3a0] sm:$0xff]
    %v226 = vld [vmem:[#allocation2 + $0x3a8] sm:$0xff]
    %v227 = vld [vmem:[#allocation2 + $0x3b0] sm:$0xff]
    %v228 = vld [vmem:[#allocation2 + $0x3b8] sm:$0xff]
    %v229 = vld [vmem:[#allocation2 + $0x3c0] sm:$0xff]
    %v230 = vld [vmem:[#allocation2 + $0x3c8] sm:$0xff]
    %v231 = vld [vmem:[#allocation2 + $0x3d0] sm:$0xff]
    %v232 = vld [vmem:[#allocation2 + $0x3d8] sm:$0xff]
    %v233 = vld [vmem:[#allocation2 + $0x3e0] sm:$0xff]
    %v234 = vld [vmem:[#allocation2 + $0x3e8] sm:$0xff]
    %v235 = vld [vmem:[#allocation2 + $0x3f0] sm:$0xff]
    %v236 = vld [vmem:[#allocation2 + $0x3f8] sm:$0xff]
    %v237 = vld [vmem:[%s2] sm:$0x3]
    %v239 = vperm.slane %v237, 0
    %v240 = vperm.slane %v237, 1
    %v371 = vunpack.c.l.b16 %v109
    %v372 = vunpack.c.h.b16 %v109
    %v373 = vunpack.c.l.b16 %v110
    %v374 = vunpack.c.h.b16 %v110
    %v375 = vunpack.c.l.b16 %v111
    %v376 = vunpack.c.h.b16 %v111
    %v377 = vunpack.c.l.b16 %v112
    %v378 = vunpack.c.h.b16 %v112
    %v379 = vunpack.c.l.b16 %v113
    %v380 = vunpack.c.h.b16 %v113
    %v381 = vunpack.c.l.b16 %v114
    %v382 = vunpack.c.h.b16 %v114
    %v383 = vunpack.c.l.b16 %v115
    %v384 = vunpack.c.h.b16 %v115
    %v385 = vunpack.c.l.b16 %v116
    %v386 = vunpack.c.h.b16 %v116
    %v387 = vunpack.c.l.b16 %v117
    %v388 = vunpack.c.h.b16 %v117
    %v389 = vunpack.c.l.b16 %v118
    %v390 = vunpack.c.h.b16 %v118
    %v391 = vunpack.c.l.b16 %v119
    %v392 = vunpack.c.h.b16 %v119
    %v393 = vunpack.c.l.b16 %v120
    %v394 = vunpack.c.h.b16 %v120
    %v395 = vunpack.c.l.b16 %v121
    %v396 = vunpack.c.h.b16 %v121
    %v397 = vunpack.c.l.b16 %v122
    %v398 = vunpack.c.h.b16 %v122
    %v399 = vunpack.c.l.b16 %v123
    %v400 = vunpack.c.h.b16 %v123
    %v401 = vunpack.c.l.b16 %v124
    %v402 = vunpack.c.h.b16 %v124
    %v403 = vunpack.c.l.b16 %v125
    %v404 = vunpack.c.h.b16 %v125
    %v405 = vunpack.c.l.b16 %v126
    %v406 = vunpack.c.h.b16 %v126
    %v407 = vunpack.c.l.b16 %v127
    %v408 = vunpack.c.h.b16 %v127
    %v409 = vunpack.c.l.b16 %v128
    %v410 = vunpack.c.h.b16 %v128
    %v411 = vunpack.c.l.b16 %v129
    %v412 = vunpack.c.h.b16 %v129
    %v413 = vunpack.c.l.b16 %v130
    %v414 = vunpack.c.h.b16 %v130
    %v415 = vunpack.c.l.b16 %v131
    %v416 = vunpack.c.h.b16 %v131
    %v417 = vunpack.c.l.b16 %v132
    %v418 = vunpack.c.h.b16 %v132
    %v419 = vunpack.c.l.b16 %v133
    %v420 = vunpack.c.h.b16 %v133
    %v421 = vunpack.c.l.b16 %v134
    %v422 = vunpack.c.h.b16 %v134
    %v423 = vunpack.c.l.b16 %v135
    %v424 = vunpack.c.h.b16 %v135
    %v425 = vunpack.c.l.b16 %v136
    %v426 = vunpack.c.h.b16 %v136
    %v427 = vunpack.c.l.b16 %v137
    %v428 = vunpack.c.h.b16 %v137
    %v429 = vunpack.c.l.b16 %v138
    %v430 = vunpack.c.h.b16 %v138
    %v431 = vunpack.c.l.b16 %v139
    %v432 = vunpack.c.h.b16 %v139
    %v433 = vunpack.c.l.b16 %v140
    %v434 = vunpack.c.h.b16 %v140
    %v435 = vunpack.c.l.b16 %v141
    %v436 = vunpack.c.h.b16 %v141
    %v437 = vunpack.c.l.b16 %v142
    %v438 = vunpack.c.h.b16 %v142
    %v439 = vunpack.c.l.b16 %v143
    %v440 = vunpack.c.h.b16 %v143
    %v441 = vunpack.c.l.b16 %v144
    %v442 = vunpack.c.h.b16 %v144
    %v443 = vunpack.c.l.b16 %v145
    %v444 = vunpack.c.h.b16 %v145
    %v445 = vunpack.c.l.b16 %v146
    %v446 = vunpack.c.h.b16 %v146
    %v447 = vunpack.c.l.b16 %v147
    %v448 = vunpack.c.h.b16 %v147
    %v449 = vunpack.c.l.b16 %v148
    %v450 = vunpack.c.h.b16 %v148
    %v451 = vunpack.c.l.b16 %v149
    %v452 = vunpack.c.h.b16 %v149
    %v453 = vunpack.c.l.b16 %v150
    %v454 = vunpack.c.h.b16 %v150
    %v455 = vunpack.c.l.b16 %v151
    %v456 = vunpack.c.h.b16 %v151
    %v457 = vunpack.c.l.b16 %v152
    %v458 = vunpack.c.h.b16 %v152
    %v459 = vunpack.c.l.b16 %v153
    %v460 = vunpack.c.h.b16 %v153
    %v461 = vunpack.c.l.b16 %v154
    %v462 = vunpack.c.h.b16 %v154
    %v463 = vunpack.c.l.b16 %v155
    %v464 = vunpack.c.h.b16 %v155
    %v465 = vunpack.c.l.b16 %v156
    %v466 = vunpack.c.h.b16 %v156
    %v467 = vunpack.c.l.b16 %v157
    %v468 = vunpack.c.h.b16 %v157
    %v469 = vunpack.c.l.b16 %v158
    %v470 = vunpack.c.h.b16 %v158
    %v471 = vunpack.c.l.b16 %v159
    %v472 = vunpack.c.h.b16 %v159
    %v473 = vunpack.c.l.b16 %v160
    %v474 = vunpack.c.h.b16 %v160
    %v475 = vunpack.c.l.b16 %v161
    %v476 = vunpack.c.h.b16 %v161
    %v477 = vunpack.c.l.b16 %v162
    %v478 = vunpack.c.h.b16 %v162
    %v479 = vunpack.c.l.b16 %v163
    %v480 = vunpack.c.h.b16 %v163
    %v481 = vunpack.c.l.b16 %v164
    %v482 = vunpack.c.h.b16 %v164
    %v483 = vunpack.c.l.b16 %v165
    %v484 = vunpack.c.h.b16 %v165
    %v485 = vunpack.c.l.b16 %v166
    %v486 = vunpack.c.h.b16 %v166
    %v487 = vunpack.c.l.b16 %v167
    %v488 = vunpack.c.h.b16 %v167
    %v489 = vunpack.c.l.b16 %v168
    %v490 = vunpack.c.h.b16 %v168
    %v491 = vunpack.c.l.b16 %v169
    %v492 = vunpack.c.h.b16 %v169
    %v493 = vunpack.c.l.b16 %v170
    %v494 = vunpack.c.h.b16 %v170
    %v495 = vunpack.c.l.b16 %v171
    %v496 = vunpack.c.h.b16 %v171
    %v497 = vunpack.c.l.b16 %v172
    %v498 = vunpack.c.h.b16 %v172
    %v499 = vunpack.c.l.b16 %v173
    %v500 = vunpack.c.h.b16 %v173
    %v501 = vunpack.c.l.b16 %v174
    %v502 = vunpack.c.h.b16 %v174
    %v503 = vunpack.c.l.b16 %v175
    %v504 = vunpack.c.h.b16 %v175
    %v505 = vunpack.c.l.b16 %v176
    %v506 = vunpack.c.h.b16 %v176
    %v507 = vunpack.c.l.b16 %v177
    %v508 = vunpack.c.h.b16 %v177
    %v509 = vunpack.c.l.b16 %v178
    %v510 = vunpack.c.h.b16 %v178
    %v511 = vunpack.c.l.b16 %v179
    %v512 = vunpack.c.h.b16 %v179
    %v513 = vunpack.c.l.b16 %v180
    %v514 = vunpack.c.h.b16 %v180
    %v515 = vunpack.c.l.b16 %v181
    %v516 = vunpack.c.h.b16 %v181
    %v517 = vunpack.c.l.b16 %v182
    %v518 = vunpack.c.h.b16 %v182
    %v519 = vunpack.c.l.b16 %v183
    %v520 = vunpack.c.h.b16 %v183
    %v521 = vunpack.c.l.b16 %v184
    %v522 = vunpack.c.h.b16 %v184
    %v523 = vunpack.c.l.b16 %v185
    %v524 = vunpack.c.h.b16 %v185
    %v525 = vunpack.c.l.b16 %v186
    %v526 = vunpack.c.h.b16 %v186
    %v527 = vunpack.c.l.b16 %v187
    %v528 = vunpack.c.h.b16 %v187
    %v529 = vunpack.c.l.b16 %v188
    %v530 = vunpack.c.h.b16 %v188
    %v531 = vunpack.c.l.b16 %v189
    %v532 = vunpack.c.h.b16 %v189
    %v533 = vunpack.c.l.b16 %v190
    %v534 = vunpack.c.h.b16 %v190
    %v535 = vunpack.c.l.b16 %v191
    %v536 = vunpack.c.h.b16 %v191
    %v537 = vunpack.c.l.b16 %v192
    %v538 = vunpack.c.h.b16 %v192
    %v539 = vunpack.c.l.b16 %v193
    %v540 = vunpack.c.h.b16 %v193
    %v541 = vunpack.c.l.b16 %v194
    %v542 = vunpack.c.h.b16 %v194
    %v543 = vunpack.c.l.b16 %v195
    %v544 = vunpack.c.h.b16 %v195
    %v545 = vunpack.c.l.b16 %v196
    %v546 = vunpack.c.h.b16 %v196
    %v547 = vunpack.c.l.b16 %v197
    %v548 = vunpack.c.h.b16 %v197
    %v549 = vunpack.c.l.b16 %v198
    %v550 = vunpack.c.h.b16 %v198
    %v551 = vunpack.c.l.b16 %v199
    %v552 = vunpack.c.h.b16 %v199
    %v553 = vunpack.c.l.b16 %v200
    %v554 = vunpack.c.h.b16 %v200
    %v555 = vunpack.c.l.b16 %v201
    %v556 = vunpack.c.h.b16 %v201
    %v557 = vunpack.c.l.b16 %v202
    %v558 = vunpack.c.h.b16 %v202
    %v559 = vunpack.c.l.b16 %v203
    %v560 = vunpack.c.h.b16 %v203
    %v561 = vunpack.c.l.b16 %v204
    %v562 = vunpack.c.h.b16 %v204
    %v563 = vunpack.c.l.b16 %v205
    %v564 = vunpack.c.h.b16 %v205
    %v565 = vunpack.c.l.b16 %v206
    %v566 = vunpack.c.h.b16 %v206
    %v567 = vunpack.c.l.b16 %v207
    %v568 = vunpack.c.h.b16 %v207
    %v569 = vunpack.c.l.b16 %v208
    %v570 = vunpack.c.h.b16 %v208
    %v571 = vunpack.c.l.b16 %v209
    %v572 = vunpack.c.h.b16 %v209
    %v573 = vunpack.c.l.b16 %v210
    %v574 = vunpack.c.h.b16 %v210
    %v575 = vunpack.c.l.b16 %v211
    %v576 = vunpack.c.h.b16 %v211
    %v577 = vunpack.c.l.b16 %v212
    %v578 = vunpack.c.h.b16 %v212
    %v579 = vunpack.c.l.b16 %v213
    %v580 = vunpack.c.h.b16 %v213
    %v581 = vunpack.c.l.b16 %v214
    %v582 = vunpack.c.h.b16 %v214
    %v583 = vunpack.c.l.b16 %v215
    %v584 = vunpack.c.h.b16 %v215
    %v585 = vunpack.c.l.b16 %v216
    %v586 = vunpack.c.h.b16 %v216
    %v587 = vunpack.c.l.b16 %v217
    %v588 = vunpack.c.h.b16 %v217
    %v589 = vunpack.c.l.b16 %v218
    %v590 = vunpack.c.h.b16 %v218
    %v591 = vunpack.c.l.b16 %v219
    %v592 = vunpack.c.h.b16 %v219
    %v593 = vunpack.c.l.b16 %v220
    %v594 = vunpack.c.h.b16 %v220
    %v595 = vunpack.c.l.b16 %v221
    %v596 = vunpack.c.h.b16 %v221
    %v597 = vunpack.c.l.b16 %v222
    %v598 = vunpack.c.h.b16 %v222
    %v599 = vunpack.c.l.b16 %v223
    %v600 = vunpack.c.h.b16 %v223
    %v601 = vunpack.c.l.b16 %v224
    %v602 = vunpack.c.h.b16 %v224
    %v603 = vunpack.c.l.b16 %v225
    %v604 = vunpack.c.h.b16 %v225
    %v605 = vunpack.c.l.b16 %v226
    %v606 = vunpack.c.h.b16 %v226
    %v607 = vunpack.c.l.b16 %v227
    %v608 = vunpack.c.h.b16 %v227
    %v609 = vunpack.c.l.b16 %v228
    %v610 = vunpack.c.h.b16 %v228
    %v611 = vunpack.c.l.b16 %v229
    %v612 = vunpack.c.h.b16 %v229
    %v613 = vunpack.c.l.b16 %v230
    %v614 = vunpack.c.h.b16 %v230
    %v615 = vunpack.c.l.b16 %v231
    %v616 = vunpack.c.h.b16 %v231
    %v617 = vunpack.c.l.b16 %v232
    %v618 = vunpack.c.h.b16 %v232
    %v619 = vunpack.c.l.b16 %v233
    %v620 = vunpack.c.h.b16 %v233
    %v621 = vunpack.c.l.b16 %v234
    %v622 = vunpack.c.h.b16 %v234
    %v623 = vunpack.c.l.b16 %v235
    %v624 = vunpack.c.h.b16 %v235
    %v625 = vunpack.c.l.b16 %v236
    %v626 = vunpack.c.h.b16 %v236
    %v627 = vpack.c.b16 %v373, %v371
    %v628 = vpack.c.b16 %v374, %v372
    %v629 = vpack.c.b16 %v377, %v375
    %v630 = vpack.c.b16 %v378, %v376
    %v631 = vpack.c.b16 %v381, %v379
    %v632 = vpack.c.b16 %v382, %v380
    %v633 = vpack.c.b16 %v385, %v383
    %v634 = vpack.c.b16 %v386, %v384
    %v635 = vpack.c.b16 %v389, %v387
    %v636 = vpack.c.b16 %v390, %v388
    %v637 = vpack.c.b16 %v393, %v391
    %v638 = vpack.c.b16 %v394, %v392
    %v639 = vpack.c.b16 %v397, %v395
    %v640 = vpack.c.b16 %v398, %v396
    %v641 = vpack.c.b16 %v401, %v399
    %v642 = vpack.c.b16 %v402, %v400
    %v643 = vpack.c.b16 %v405, %v403
    %v644 = vpack.c.b16 %v406, %v404
    %v645 = vpack.c.b16 %v409, %v407
    %v646 = vpack.c.b16 %v410, %v408
    %v647 = vpack.c.b16 %v413, %v411
    %v648 = vpack.c.b16 %v414, %v412
    %v649 = vpack.c.b16 %v417, %v415
    %v650 = vpack.c.b16 %v418, %v416
    %v651 = vpack.c.b16 %v421, %v419
    %v652 = vpack.c.b16 %v422, %v420
    %v653 = vpack.c.b16 %v425, %v423
    %v654 = vpack.c.b16 %v426, %v424
    %v655 = vpack.c.b16 %v429, %v427
    %v656 = vpack.c.b16 %v430, %v428
    %v657 = vpack.c.b16 %v433, %v431
    %v658 = vpack.c.b16 %v434, %v432
    %v659 = vpack.c.b16 %v437, %v435
    %v660 = vpack.c.b16 %v438, %v436
    %v661 = vpack.c.b16 %v441, %v439
    %v662 = vpack.c.b16 %v442, %v440
    %v663 = vpack.c.b16 %v445, %v443
    %v664 = vpack.c.b16 %v446, %v444
    %v665 = vpack.c.b16 %v449, %v447
    %v666 = vpack.c.b16 %v450, %v448
    %v667 = vpack.c.b16 %v453, %v451
    %v668 = vpack.c.b16 %v454, %v452
    %v669 = vpack.c.b16 %v457, %v455
    %v670 = vpack.c.b16 %v458, %v456
    %v671 = vpack.c.b16 %v461, %v459
    %v672 = vpack.c.b16 %v462, %v460
    %v673 = vpack.c.b16 %v465, %v463
    %v674 = vpack.c.b16 %v466, %v464
    %v675 = vpack.c.b16 %v469, %v467
    %v676 = vpack.c.b16 %v470, %v468
    %v677 = vpack.c.b16 %v473, %v471
    %v678 = vpack.c.b16 %v474, %v472
    %v679 = vpack.c.b16 %v477, %v475
    %v680 = vpack.c.b16 %v478, %v476
    %v681 = vpack.c.b16 %v481, %v479
    %v682 = vpack.c.b16 %v482, %v480
    %v683 = vpack.c.b16 %v485, %v483
    %v684 = vpack.c.b16 %v486, %v484
    %v685 = vpack.c.b16 %v489, %v487
    %v686 = vpack.c.b16 %v490, %v488
    %v687 = vpack.c.b16 %v493, %v491
    %v688 = vpack.c.b16 %v494, %v492
    %v689 = vpack.c.b16 %v497, %v495
    %v690 = vpack.c.b16 %v498, %v496
    %v691 = vpack.c.b16 %v501, %v499
    %v692 = vpack.c.b16 %v502, %v500
    %v693 = vpack.c.b16 %v505, %v503
    %v694 = vpack.c.b16 %v506, %v504
    %v695 = vpack.c.b16 %v509, %v507
    %v696 = vpack.c.b16 %v510, %v508
    %v697 = vpack.c.b16 %v513, %v511
    %v698 = vpack.c.b16 %v514, %v512
    %v699 = vpack.c.b16 %v517, %v515
    %v700 = vpack.c.b16 %v518, %v516
    %v701 = vpack.c.b16 %v521, %v519
    %v702 = vpack.c.b16 %v522, %v520
    %v703 = vpack.c.b16 %v525, %v523
    %v704 = vpack.c.b16 %v526, %v524
    %v705 = vpack.c.b16 %v529, %v527
    %v706 = vpack.c.b16 %v530, %v528
    %v707 = vpack.c.b16 %v533, %v531
    %v708 = vpack.c.b16 %v534, %v532
    %v709 = vpack.c.b16 %v537, %v535
    %v710 = vpack.c.b16 %v538, %v536
    %v711 = vpack.c.b16 %v541, %v539
    %v712 = vpack.c.b16 %v542, %v540
    %v713 = vpack.c.b16 %v545, %v543
    %v714 = vpack.c.b16 %v546, %v544
    %v715 = vpack.c.b16 %v549, %v547
    %v716 = vpack.c.b16 %v550, %v548
    %v717 = vpack.c.b16 %v553, %v551
    %v718 = vpack.c.b16 %v554, %v552
    %v719 = vpack.c.b16 %v557, %v555
    %v720 = vpack.c.b16 %v558, %v556
    %v721 = vpack.c.b16 %v561, %v559
    %v722 = vpack.c.b16 %v562, %v560
    %v723 = vpack.c.b16 %v565, %v563
    %v724 = vpack.c.b16 %v566, %v564
    %v725 = vpack.c.b16 %v569, %v567
    %v726 = vpack.c.b16 %v570, %v568
    %v727 = vpack.c.b16 %v573, %v571
    %v728 = vpack.c.b16 %v574, %v572
    %v729 = vpack.c.b16 %v577, %v575
    %v730 = vpack.c.b16 %v578, %v576
    %v731 = vpack.c.b16 %v581, %v579
    %v732 = vpack.c.b16 %v582, %v580
    %v733 = vpack.c.b16 %v585, %v583
    %v734 = vpack.c.b16 %v586, %v584
    %v735 = vpack.c.b16 %v589, %v587
    %v736 = vpack.c.b16 %v590, %v588
    %v737 = vpack.c.b16 %v593, %v591
    %v738 = vpack.c.b16 %v594, %v592
    %v739 = vpack.c.b16 %v597, %v595
    %v740 = vpack.c.b16 %v598, %v596
    %v741 = vpack.c.b16 %v601, %v599
    %v742 = vpack.c.b16 %v602, %v600
    %v743 = vpack.c.b16 %v605, %v603
    %v744 = vpack.c.b16 %v606, %v604
    %v745 = vpack.c.b16 %v609, %v607
    %v746 = vpack.c.b16 %v610, %v608
    %v747 = vpack.c.b16 %v613, %v611
    %v748 = vpack.c.b16 %v614, %v612
    %v749 = vpack.c.b16 %v617, %v615
    %v750 = vpack.c.b16 %v618, %v616
    %v751 = vpack.c.b16 %v621, %v619
    %v752 = vpack.c.b16 %v622, %v620
    %v753 = vpack.c.b16 %v625, %v623
    %v754 = vpack.c.b16 %v626, %v624
    %883 = vmatpush.bf16.msra.mxu0 %v641
    %884 = vmatpush.bf16.msra.mxu0 %v639
    %885 = vmatpush.bf16.msra.mxu0 %v637
    %886 = vmatpush.bf16.msra.mxu0 %v635
    %887 = vmatpush.bf16.msra.mxu0 %v633
    %888 = vmatpush.bf16.msra.mxu0 %v631
    %889 = vmatpush.bf16.msra.mxu0 %v629
    %890 = vmatpush.bf16.msra.mxu0 %v627
    %891 = vmatmul.bf16.gmra.mxu0 %v101
    %v892 = vpop.f32.mrf.mxu0
    %v893 = vadd.f32 %v239, %v892
    %v894 = vpop.f32.mrf.mxu0
    %895 = vdwg.mxu0
    %896 = vmatpush.bf16.msra.mxu0 %v657
    %897 = vmatpush.bf16.msra.mxu0 %v655
    %898 = vmatpush.bf16.msra.mxu0 %v653
    %899 = vmatpush.bf16.msra.mxu0 %v651
    %900 = vmatpush.bf16.msra.mxu0 %v649
    %901 = vmatpush.bf16.msra.mxu0 %v647
    %902 = vmatpush.bf16.msra.mxu0 %v645
    %903 = vmatpush.bf16.msra.mxu0 %v643
    %904 = vmatmul.bf16.gmra.mxu0 %v102
    %v905 = vpop.f32.mrf.mxu0
    %v906 = vadd.f32 %v893, %v905
    %v907 = vpop.f32.mrf.mxu0
    %908 = vdwg.mxu0
    %909 = vmatpush.bf16.msra.mxu0 %v673
    %910 = vmatpush.bf16.msra.mxu0 %v671
    %911 = vmatpush.bf16.msra.mxu0 %v669
    %912 = vmatpush.bf16.msra.mxu0 %v667
    %913 = vmatpush.bf16.msra.mxu0 %v665
    %914 = vmatpush.bf16.msra.mxu0 %v663
    %915 = vmatpush.bf16.msra.mxu0 %v661
    %916 = vmatpush.bf16.msra.mxu0 %v659
    %917 = vmatmul.bf16.gmra.mxu0 %v103
    %v918 = vpop.f32.mrf.mxu0
    %v919 = vadd.f32 %v906, %v918
    %v920 = vpop.f32.mrf.mxu0
    %921 = vdwg.mxu0
    %922 = vmatpush.bf16.msra.mxu0 %v689
    %923 = vmatpush.bf16.msra.mxu0 %v687
    %924 = vmatpush.bf16.msra.mxu0 %v685
    %925 = vmatpush.bf16.msra.mxu0 %v683
    %926 = vmatpush.bf16.msra.mxu0 %v681
    %927 = vmatpush.bf16.msra.mxu0 %v679
    %928 = vmatpush.bf16.msra.mxu0 %v677
    %929 = vmatpush.bf16.msra.mxu0 %v675
    %930 = vmatmul.bf16.gmra.mxu0 %v104
    %v931 = vpop.f32.mrf.mxu0
    %v932 = vadd.f32 %v919, %v931
    %v933 = vpop.f32.mrf.mxu0
    %934 = vdwg.mxu0
    %935 = vmatpush.bf16.msra.mxu0 %v705
    %936 = vmatpush.bf16.msra.mxu0 %v703
    %937 = vmatpush.bf16.msra.mxu0 %v701
    %938 = vmatpush.bf16.msra.mxu0 %v699
    %939 = vmatpush.bf16.msra.mxu0 %v697
    %940 = vmatpush.bf16.msra.mxu0 %v695
    %941 = vmatpush.bf16.msra.mxu0 %v693
    %942 = vmatpush.bf16.msra.mxu0 %v691
    %943 = vmatmul.bf16.gmra.mxu0 %v105
    %v944 = vpop.f32.mrf.mxu0
    %v945 = vadd.f32 %v932, %v944
    %v946 = vpop.f32.mrf.mxu0
    %947 = vdwg.mxu0
    %948 = vmatpush.bf16.msra.mxu0 %v721
    %949 = vmatpush.bf16.msra.mxu0 %v719
    %950 = vmatpush.bf16.msra.mxu0 %v717
    %951 = vmatpush.bf16.msra.mxu0 %v715
    %952 = vmatpush.bf16.msra.mxu0 %v713
    %953 = vmatpush.bf16.msra.mxu0 %v711
    %954 = vmatpush.bf16.msra.mxu0 %v709
    %955 = vmatpush.bf16.msra.mxu0 %v707
    %956 = vmatmul.bf16.gmra.mxu0 %v106
    %v957 = vpop.f32.mrf.mxu0
    %v958 = vadd.f32 %v945, %v957
    %v959 = vpop.f32.mrf.mxu0
    %960 = vdwg.mxu0
    %961 = vmatpush.bf16.msra.mxu0 %v737
    %962 = vmatpush.bf16.msra.mxu0 %v735
    %963 = vmatpush.bf16.msra.mxu0 %v733
    %964 = vmatpush.bf16.msra.mxu0 %v731
    %965 = vmatpush.bf16.msra.mxu0 %v729
    %966 = vmatpush.bf16.msra.mxu0 %v727
    %967 = vmatpush.bf16.msra.mxu0 %v725
    %968 = vmatpush.bf16.msra.mxu0 %v723
    %969 = vmatmul.bf16.gmra.mxu0 %v107
    %v970 = vpop.f32.mrf.mxu0
    %v971 = vadd.f32 %v958, %v970
    %v972 = vpop.f32.mrf.mxu0
    %973 = vdwg.mxu0
    %974 = vmatpush.bf16.msra.mxu0 %v753
    %975 = vmatpush.bf16.msra.mxu0 %v751
    %976 = vmatpush.bf16.msra.mxu0 %v749
    %977 = vmatpush.bf16.msra.mxu0 %v747
    %978 = vmatpush.bf16.msra.mxu0 %v745
    %979 = vmatpush.bf16.msra.mxu0 %v743
    %980 = vmatpush.bf16.msra.mxu0 %v741
    %981 = vmatpush.bf16.msra.mxu0 %v739
    %982 = vmatmul.bf16.gmra.mxu0 %v108
    %v983 = vpop.f32.mrf.mxu0
    %v984 = vadd.f32 %v971, %v983
    %v985 = vpop.f32.mrf.mxu0
    %986 = vdwg.mxu0
    %987 = vmatpush.bf16.msra.mxu0 %v642
    %988 = vmatpush.bf16.msra.mxu0 %v640
    %989 = vmatpush.bf16.msra.mxu0 %v638
    %990 = vmatpush.bf16.msra.mxu0 %v636
    %991 = vmatpush.bf16.msra.mxu0 %v634
    %992 = vmatpush.bf16.msra.mxu0 %v632
    %993 = vmatpush.bf16.msra.mxu0 %v630
    %994 = vmatpush.bf16.msra.mxu0 %v628
    %995 = vmatmul.bf16.gmra.mxu0 %v101
    %v996 = vpop.f32.mrf.mxu0
    %v997 = vadd.f32 %v240, %v996
    %v998 = vpop.f32.mrf.mxu0
    %999 = vdwg.mxu0
    %1000 = vmatpush.bf16.msra.mxu0 %v658
    %1001 = vmatpush.bf16.msra.mxu0 %v656
    %1002 = vmatpush.bf16.msra.mxu0 %v654
    %1003 = vmatpush.bf16.msra.mxu0 %v652
    %1004 = vmatpush.bf16.msra.mxu0 %v650
    %1005 = vmatpush.bf16.msra.mxu0 %v648
    %1006 = vmatpush.bf16.msra.mxu0 %v646
    %1007 = vmatpush.bf16.msra.mxu0 %v644
    %1008 = vmatmul.bf16.gmra.mxu0 %v102
    %v1009 = vpop.f32.mrf.mxu0
    %v1010 = vadd.f32 %v997, %v1009
    %v1011 = vpop.f32.mrf.mxu0
    %1012 = vdwg.mxu0
    %1013 = vmatpush.bf16.msra.mxu0 %v674
    %1014 = vmatpush.bf16.msra.mxu0 %v672
    %1015 = vmatpush.bf16.msra.mxu0 %v670
    %1016 = vmatpush.bf16.msra.mxu0 %v668
    %1017 = vmatpush.bf16.msra.mxu0 %v666
    %1018 = vmatpush.bf16.msra.mxu0 %v664
    %1019 = vmatpush.bf16.msra.mxu0 %v662
    %1020 = vmatpush.bf16.msra.mxu0 %v660
    %1021 = vmatmul.bf16.gmra.mxu0 %v103
    %v1022 = vpop.f32.mrf.mxu0
    %v1023 = vadd.f32 %v1010, %v1022
    %v1024 = vpop.f32.mrf.mxu0
    %1025 = vdwg.mxu0
    %1026 = vmatpush.bf16.msra.mxu0 %v690
    %1027 = vmatpush.bf16.msra.mxu0 %v688
    %1028 = vmatpush.bf16.msra.mxu0 %v686
    %1029 = vmatpush.bf16.msra.mxu0 %v684
    %1030 = vmatpush.bf16.msra.mxu0 %v682
    %1031 = vmatpush.bf16.msra.mxu0 %v680
    %1032 = vmatpush.bf16.msra.mxu0 %v678
    %1033 = vmatpush.bf16.msra.mxu0 %v676
    %1034 = vmatmul.bf16.gmra.mxu0 %v104
    %v1035 = vpop.f32.mrf.mxu0
    %v1036 = vadd.f32 %v1023, %v1035
    %v1037 = vpop.f32.mrf.mxu0
    %1038 = vdwg.mxu0
    %1039 = vmatpush.bf16.msra.mxu0 %v706
    %1040 = vmatpush.bf16.msra.mxu0 %v704
    %1041 = vmatpush.bf16.msra.mxu0 %v702
    %1042 = vmatpush.bf16.msra.mxu0 %v700
    %1043 = vmatpush.bf16.msra.mxu0 %v698
    %1044 = vmatpush.bf16.msra.mxu0 %v696
    %1045 = vmatpush.bf16.msra.mxu0 %v694
    %1046 = vmatpush.bf16.msra.mxu0 %v692
    %1047 = vmatmul.bf16.gmra.mxu0 %v105
    %v1048 = vpop.f32.mrf.mxu0
    %v1049 = vadd.f32 %v1036, %v1048
    %v1050 = vpop.f32.mrf.mxu0
    %1051 = vdwg.mxu0
    %1052 = vmatpush.bf16.msra.mxu0 %v722
    %1053 = vmatpush.bf16.msra.mxu0 %v720
    %1054 = vmatpush.bf16.msra.mxu0 %v718
    %1055 = vmatpush.bf16.msra.mxu0 %v716
    %1056 = vmatpush.bf16.msra.mxu0 %v714
    %1057 = vmatpush.bf16.msra.mxu0 %v712
    %1058 = vmatpush.bf16.msra.mxu0 %v710
    %1059 = vmatpush.bf16.msra.mxu0 %v708
    %1060 = vmatmul.bf16.gmra.mxu0 %v106
    %v1061 = vpop.f32.mrf.mxu0
    %v1062 = vadd.f32 %v1049, %v1061
    %v1063 = vpop.f32.mrf.mxu0
    %1064 = vdwg.mxu0
    %1065 = vmatpush.bf16.msra.mxu0 %v738
    %1066 = vmatpush.bf16.msra.mxu0 %v736
    %1067 = vmatpush.bf16.msra.mxu0 %v734
    %1068 = vmatpush.bf16.msra.mxu0 %v732
    %1069 = vmatpush.bf16.msra.mxu0 %v730
    %1070 = vmatpush.bf16.msra.mxu0 %v728
    %1071 = vmatpush.bf16.msra.mxu0 %v726
    %1072 = vmatpush.bf16.msra.mxu0 %v724
    %1073 = vmatmul.bf16.gmra.mxu0 %v107
    %v1074 = vpop.f32.mrf.mxu0
    %v1075 = vadd.f32 %v1062, %v1074
    %v1076 = vpop.f32.mrf.mxu0
    %1077 = vdwg.mxu0
    %1078 = vmatpush.bf16.msra.mxu0 %v754
    %1079 = vmatpush.bf16.msra.mxu0 %v752
    %1080 = vmatpush.bf16.msra.mxu0 %v750
    %1081 = vmatpush.bf16.msra.mxu0 %v748
    %1082 = vmatpush.bf16.msra.mxu0 %v746
    %1083 = vmatpush.bf16.msra.mxu0 %v744
    %1084 = vmatpush.bf16.msra.mxu0 %v742
    %1085 = vmatpush.bf16.msra.mxu0 %v740
    %1086 = vmatmul.bf16.gmra.mxu0 %v108
    %v1087 = vpop.f32.mrf.mxu0
    %v1088 = vadd.f32 %v1075, %v1087
    %v1089 = vpop.f32.mrf.mxu0
    %1090 = vdwg.mxu0
    %v1091 = vmax.f32 %v984, 0.0
    %v1092 = vmax.f32 %v1088, 0.0
    %v1093 = vpack.c.bf16 %v1091, %v1091
    %v1094 = vpack.c.bf16 %v1092, %v1092
    %v1095 = vld [vmem:[%s3] sm:$0xf]
    %v1096 = vld [vmem:[%s3 + $0x4] sm:$0xf]
    %v1097 = vld [vmem:[%s3 + $0x8] sm:$0xf]
    %v1098 = vld [vmem:[%s3 + $0xc] sm:$0xf]
    %v1099 = vld [vmem:[%s3 + $0x10] sm:$0xf]
    %v1100 = vld [vmem:[%s3 + $0x14] sm:$0xf]
    %v1101 = vld [vmem:[%s3 + $0x18] sm:$0xf]
    %v1102 = vld [vmem:[%s3 + $0x1c] sm:$0xf]
    %v1103 = vld [vmem:[%s3 + $0x20] sm:$0xf]
    %v1104 = vld [vmem:[%s3 + $0x24] sm:$0xf]
    %v1105 = vld [vmem:[%s3 + $0x28] sm:$0xf]
    %v1106 = vld [vmem:[%s3 + $0x2c] sm:$0xf]
    %v1107 = vld [vmem:[%s3 + $0x30] sm:$0xf]
    %v1108 = vld [vmem:[%s3 + $0x34] sm:$0xf]
    %v1109 = vld [vmem:[%s3 + $0x38] sm:$0xf]
    %v1110 = vld [vmem:[%s3 + $0x3c] sm:$0xf]
    %v1111 = vld [vmem:[%s3 + $0x40] sm:$0xf]
    %v1112 = vld [vmem:[%s3 + $0x44] sm:$0xf]
    %v1113 = vld [vmem:[%s3 + $0x48] sm:$0xf]
    %v1114 = vld [vmem:[%s3 + $0x4c] sm:$0xf]
    %v1115 = vld [vmem:[%s3 + $0x50] sm:$0xf]
    %v1116 = vld [vmem:[%s3 + $0x54] sm:$0xf]
    %v1117 = vld [vmem:[%s3 + $0x58] sm:$0xf]
    %v1118 = vld [vmem:[%s3 + $0x5c] sm:$0xf]
    %v1119 = vld [vmem:[%s3 + $0x60] sm:$0xf]
    %v1120 = vld [vmem:[%s3 + $0x64] sm:$0xf]
    %v1121 = vld [vmem:[%s3 + $0x68] sm:$0xf]
    %v1122 = vld [vmem:[%s3 + $0x6c] sm:$0xf]
    %v1123 = vld [vmem:[%s3 + $0x70] sm:$0xf]
    %v1124 = vld [vmem:[%s3 + $0x74] sm:$0xf]
    %v1125 = vld [vmem:[%s3 + $0x78] sm:$0xf]
    %v1126 = vld [vmem:[%s3 + $0x7c] sm:$0xf]
    %v1127 = vld [vmem:[%s4] sm:$0x1]
    %v1129 = vperm.slane %v1127, 0
    %v1163 = vunpack.c.l.b16 %v1095
    %v1164 = vunpack.c.l.b16 %v1096
    %v1165 = vunpack.c.l.b16 %v1097
    %v1166 = vunpack.c.l.b16 %v1098
    %v1167 = vunpack.c.l.b16 %v1099
    %v1168 = vunpack.c.l.b16 %v1100
    %v1169 = vunpack.c.l.b16 %v1101
    %v1170 = vunpack.c.l.b16 %v1102
    %v1171 = vunpack.c.l.b16 %v1103
    %v1172 = vunpack.c.l.b16 %v1104
    %v1173 = vunpack.c.l.b16 %v1105
    %v1174 = vunpack.c.l.b16 %v1106
    %v1175 = vunpack.c.l.b16 %v1107
    %v1176 = vunpack.c.l.b16 %v1108
    %v1177 = vunpack.c.l.b16 %v1109
    %v1178 = vunpack.c.l.b16 %v1110
    %v1179 = vunpack.c.l.b16 %v1111
    %v1180 = vunpack.c.l.b16 %v1112
    %v1181 = vunpack.c.l.b16 %v1113
    %v1182 = vunpack.c.l.b16 %v1114
    %v1183 = vunpack.c.l.b16 %v1115
    %v1184 = vunpack.c.l.b16 %v1116
    %v1185 = vunpack.c.l.b16 %v1117
    %v1186 = vunpack.c.l.b16 %v1118
    %v1187 = vunpack.c.l.b16 %v1119
    %v1188 = vunpack.c.l.b16 %v1120
    %v1189 = vunpack.c.l.b16 %v1121
    %v1190 = vunpack.c.l.b16 %v1122
    %v1191 = vunpack.c.l.b16 %v1123
    %v1192 = vunpack.c.l.b16 %v1124
    %v1193 = vunpack.c.l.b16 %v1125
    %v1194 = vunpack.c.l.b16 %v1126
    %v1195 = vpack.c.b16 %v1164, %v1163
    %v1196 = vpack.c.b16 %v1166, %v1165
    %v1197 = vpack.c.b16 %v1168, %v1167
    %v1198 = vpack.c.b16 %v1170, %v1169
    %v1199 = vpack.c.b16 %v1172, %v1171
    %v1200 = vpack.c.b16 %v1174, %v1173
    %v1201 = vpack.c.b16 %v1176, %v1175
    %v1202 = vpack.c.b16 %v1178, %v1177
    %v1203 = vpack.c.b16 %v1180, %v1179
    %v1204 = vpack.c.b16 %v1182, %v1181
    %v1205 = vpack.c.b16 %v1184, %v1183
    %v1206 = vpack.c.b16 %v1186, %v1185
    %v1207 = vpack.c.b16 %v1188, %v1187
    %v1208 = vpack.c.b16 %v1190, %v1189
    %v1209 = vpack.c.b16 %v1192, %v1191
    %v1210 = vpack.c.b16 %v1194, %v1193
    %1227 = vmatpush.bf16.msra.mxu0 %v1202
    %1228 = vmatpush.bf16.msra.mxu0 %v1201
    %1229 = vmatpush.bf16.msra.mxu0 %v1200
    %1230 = vmatpush.bf16.msra.mxu0 %v1199
    %1231 = vmatpush.bf16.msra.mxu0 %v1198
    %1232 = vmatpush.bf16.msra.mxu0 %v1197
    %1233 = vmatpush.bf16.msra.mxu0 %v1196
    %1234 = vmatpush.bf16.msra.mxu0 %v1195
    %1235 = vmatmul.bf16.gmra.mxu0 %v1093
    %v1236 = vpop.f32.mrf.mxu0
    %v1237 = vadd.f32 %v1129, %v1236
    %v1238 = vpop.f32.mrf.mxu0
    %1239 = vdwg.mxu0
    %1240 = vmatpush.bf16.msra.mxu0 %v1210
    %1241 = vmatpush.bf16.msra.mxu0 %v1209
    %1242 = vmatpush.bf16.msra.mxu0 %v1208
    %1243 = vmatpush.bf16.msra.mxu0 %v1207
    %1244 = vmatpush.bf16.msra.mxu0 %v1206
    %1245 = vmatpush.bf16.msra.mxu0 %v1205
    %1246 = vmatpush.bf16.msra.mxu0 %v1204
    %1247 = vmatpush.bf16.msra.mxu0 %v1203
    %1248 = vmatmul.bf16.gmra.mxu0 %v1094
    %v1249 = vpop.f32.mrf.mxu0
    %v1250 = vadd.f32 %v1237, %v1249
    %v1251 = vpop.f32.mrf.mxu0
    %1252 = vdwg.mxu0
    %v1253 = vmax.f32 %v1250, 0.0
    %v1254 = vpack.c.bf16 %v1253, %v1253
    %v1255 = vld [vmem:[%s5] sm:$0xf]
    %v1256 = vld [vmem:[%s5 + $0x4] sm:$0xf]
    %v1257 = vld [vmem:[%s5 + $0x8] sm:$0xf]
    %v1258 = vld [vmem:[%s5 + $0xc] sm:$0xf]
    %v1259 = vld [vmem:[%s5 + $0x10] sm:$0xf]
    %v1260 = vld [vmem:[%s5 + $0x14] sm:$0xf]
    %v1261 = vld [vmem:[%s5 + $0x18] sm:$0xf]
    %v1262 = vld [vmem:[%s5 + $0x1c] sm:$0xf]
    %v1263 = vld [vmem:[%s6] sm:$0x1]
    %v1265 = vperm.slane %v1263, 0
    %v1275 = vunpack.c.l.b16 %v1255
    %v1276 = vunpack.c.l.b16 %v1256
    %v1277 = vunpack.c.l.b16 %v1257
    %v1278 = vunpack.c.l.b16 %v1258
    %v1279 = vunpack.c.l.b16 %v1259
    %v1280 = vunpack.c.l.b16 %v1260
    %v1281 = vunpack.c.l.b16 %v1261
    %v1282 = vunpack.c.l.b16 %v1262
    %v1283 = vpack.c.b16 %v1276, %v1275
    %v1284 = vpack.c.b16 %v1278, %v1277
    %v1285 = vpack.c.b16 %v1280, %v1279
    %v1286 = vpack.c.b16 %v1282, %v1281
    %vm1291 = vcmask 523264
    %v1293 = vsel %vm1291, %v1254, 0
    %1295 = vmatpush.bf16.msra.mxu0 0
    %1296 = vmatpush.bf16.msra.mxu0 0
    %1297 = vmatpush.bf16.msra.mxu0 0
    %1298 = vmatpush.bf16.msra.mxu0 0
    %1299 = vmatpush.bf16.msra.mxu0 %v1286
    %1300 = vmatpush.bf16.msra.mxu0 %v1285
    %1301 = vmatpush.bf16.msra.mxu0 %v1284
    %1302 = vmatpush.bf16.msra.mxu0 %v1283
    %1303 = vmatmul.bf16.gmra.mxu0 %v1293
    %v1304 = vpop.f32.mrf.mxu0
    %v1305 = vadd.f32 %v1265, %v1304
    %v1306 = vpop.f32.mrf.mxu0
    %1307 = vdwg.mxu0
    %v1308 = vmax.f32 %v1305, 0.0
    %v1309 = vpack.c.bf16 %v1308, %v1308
    %v1310 = vld [vmem:[%s7] sm:$0xf]
    %v1311 = vld [vmem:[%s7 + $0x4] sm:$0xf]
    %v1312 = vld [vmem:[%s7 + $0x8] sm:$0x3]
    %v1313 = vld [vmem:[%s8] sm:$0x1]
    %v1315 = vperm.slane %v1313, 0
    %v1320 = vunpack.c.l.b16 %v1310
    %v1321 = vunpack.c.l.b16 %v1311
    %v1322 = vunpack.c.l.b16 %v1312
    %v1323 = vpack.c.b16 %v1321, %v1320
    %v1324 = vpack.c.b16 %v1322, %v1322
    %vm1326 = vcmask 162816
    %v1328 = vsel %vm1326, %v1309, 0
    %vm1330 = vcmask 1041408
    %v1332 = vsel %vm1330, %v1324, 0
    %1334 = vmatpush.bf16.msra.mxu0 0
    %1335 = vmatpush.bf16.msra.mxu0 0
    %1336 = vmatpush.bf16.msra.mxu0 0
    %1337 = vmatpush.bf16.msra.mxu0 0
    %1338 = vmatpush.bf16.msra.mxu0 0
    %1339 = vmatpush.bf16.msra.mxu0 0
    %1340 = vmatpush.bf16.msra.mxu0 %v1332
    %1341 = vmatpush.bf16.msra.mxu0 %v1323
    %1342 = vmatmul.bf16.gmra.mxu0 %v1328
    %v1343 = vpop.f32.mrf.mxu0
    %v1344 = vadd.f32 %v1315, %v1343
    %v1345 = vpop.f32.mrf.mxu0
    %1346 = vdwg.mxu0
    %v1347 = vmax.f32 %v1344, 0.0
    %v1348 = vpack.c.bf16 %v1347, %v1347
    %v1349 = vld [vmem:[%s9] sm:$0xff]
    %v1350 = vld [vmem:[%s9 + $0x8] sm:$0xff]
    %v1351 = vld [vmem:[%s9 + $0x10] sm:$0xff]
    %v1352 = vld [vmem:[%s9 + $0x18] sm:$0xff]
    %v1353 = vld [vmem:[%s9 + $0x20] sm:$0xff]
    %v1354 = vld [vmem:[%s9 + $0x28] sm:$0xff]
    %v1355 = vld [vmem:[%s9 + $0x30] sm:$0xff]
    %v1356 = vld [vmem:[%s9 + $0x38] sm:$0xff]
    %v1357 = vld [vmem:[%s10] sm:$0x3]
    %v1359 = vperm.slane %v1357, 0
    %v1360 = vperm.slane %v1357, 1
    %v1371 = vunpack.c.l.b16 %v1349
    %v1372 = vunpack.c.h.b16 %v1349
    %v1373 = vunpack.c.l.b16 %v1350
    %v1374 = vunpack.c.h.b16 %v1350
    %v1375 = vunpack.c.l.b16 %v1351
    %v1376 = vunpack.c.h.b16 %v1351
    %v1377 = vunpack.c.l.b16 %v1352
    %v1378 = vunpack.c.h.b16 %v1352
    %v1379 = vunpack.c.l.b16 %v1353
    %v1380 = vunpack.c.h.b16 %v1353
    %v1381 = vunpack.c.l.b16 %v1354
    %v1382 = vunpack.c.h.b16 %v1354
    %v1383 = vunpack.c.l.b16 %v1355
    %v1384 = vunpack.c.h.b16 %v1355
    %v1385 = vunpack.c.l.b16 %v1356
    %v1386 = vunpack.c.h.b16 %v1356
    %v1387 = vpack.c.b16 %v1373, %v1371
    %v1388 = vpack.c.b16 %v1374, %v1372
    %v1389 = vpack.c.b16 %v1377, %v1375
    %v1390 = vpack.c.b16 %v1378, %v1376
    %v1391 = vpack.c.b16 %v1381, %v1379
    %v1392 = vpack.c.b16 %v1382, %v1380
    %v1393 = vpack.c.b16 %v1385, %v1383
    %v1394 = vpack.c.b16 %v1386, %v1384
    %v1404 = vsel %vm1291, %v1348, 0
    %1406 = vmatpush.bf16.msra.mxu0 0
    %1407 = vmatpush.bf16.msra.mxu0 0
    %1408 = vmatpush.bf16.msra.mxu0 0
    %1409 = vmatpush.bf16.msra.mxu0 0
    %1410 = vmatpush.bf16.msra.mxu0 %v1393
    %1411 = vmatpush.bf16.msra.mxu0 %v1391
    %1412 = vmatpush.bf16.msra.mxu0 %v1389
    %1413 = vmatpush.bf16.msra.mxu0 %v1387
    %1414 = vmatmul.bf16.gmra.mxu0 %v1404
    %v1415 = vpop.f32.mrf.mxu0
    %v1416 = vadd.f32 %v1359, %v1415
    %v1417 = vpop.f32.mrf.mxu0
    %1418 = vdwg.mxu0
    %1419 = vmatpush.bf16.msra.mxu0 0
    %1420 = vmatpush.bf16.msra.mxu0 0
    %1421 = vmatpush.bf16.msra.mxu0 0
    %1422 = vmatpush.bf16.msra.mxu0 0
    %1423 = vmatpush.bf16.msra.mxu0 %v1394
    %1424 = vmatpush.bf16.msra.mxu0 %v1392
    %1425 = vmatpush.bf16.msra.mxu0 %v1390
    %1426 = vmatpush.bf16.msra.mxu0 %v1388
    %1427 = vmatmul.bf16.gmra.mxu0 %v1404
    %v1428 = vpop.f32.mrf.mxu0
    %v1429 = vadd.f32 %v1360, %v1428
    %v1430 = vpop.f32.mrf.mxu0
    %1431 = vdwg.mxu0
    %v1432 = vmax.f32 %v1416, 0.0
    %v1433 = vmax.f32 %v1429, 0.0
    %v1434 = vpack.c.bf16 %v1432, %v1432
    %v1435 = vpack.c.bf16 %v1433, %v1433
    %v1436 = vld [vmem:[#allocation5] sm:$0xff]
    %v1437 = vld [vmem:[#allocation5 + $0x8] sm:$0xff]
    %v1438 = vld [vmem:[#allocation5 + $0x10] sm:$0xff]
    %v1439 = vld [vmem:[#allocation5 + $0x18] sm:$0xff]
    %v1440 = vld [vmem:[#allocation5 + $0x20] sm:$0xff]
    %v1441 = vld [vmem:[#allocation5 + $0x28] sm:$0xff]
    %v1442 = vld [vmem:[#allocation5 + $0x30] sm:$0xff]
    %v1443 = vld [vmem:[#allocation5 + $0x38] sm:$0xff]
    %v1444 = vld [vmem:[#allocation5 + $0x40] sm:$0xff]
    %v1445 = vld [vmem:[#allocation5 + $0x48] sm:$0xff]
    %v1446 = vld [vmem:[#allocation5 + $0x50] sm:$0xff]
    %v1447 = vld [vmem:[#allocation5 + $0x58] sm:$0xff]
    %v1448 = vld [vmem:[#allocation5 + $0x60] sm:$0xff]
    %v1449 = vld [vmem:[#allocation5 + $0x68] sm:$0xff]
    %v1450 = vld [vmem:[#allocation5 + $0x70] sm:$0xff]
    %v1451 = vld [vmem:[#allocation5 + $0x78] sm:$0xff]
    %v1452 = vld [vmem:[#allocation5 + $0x80] sm:$0xff]
    %v1453 = vld [vmem:[#allocation5 + $0x88] sm:$0xff]
    %v1454 = vld [vmem:[#allocation5 + $0x90] sm:$0xff]
    %v1455 = vld [vmem:[#allocation5 + $0x98] sm:$0xff]
    %v1456 = vld [vmem:[#allocation5 + $0xa0] sm:$0xff]
    %v1457 = vld [vmem:[#allocation5 + $0xa8] sm:$0xff]
    %v1458 = vld [vmem:[#allocation5 + $0xb0] sm:$0xff]
    %v1459 = vld [vmem:[#allocation5 + $0xb8] sm:$0xff]
    %v1460 = vld [vmem:[#allocation5 + $0xc0] sm:$0xff]
    %v1461 = vld [vmem:[#allocation5 + $0xc8] sm:$0xff]
    %v1462 = vld [vmem:[#allocation5 + $0xd0] sm:$0xff]
    %v1463 = vld [vmem:[#allocation5 + $0xd8] sm:$0xff]
    %v1464 = vld [vmem:[#allocation5 + $0xe0] sm:$0xff]
    %v1465 = vld [vmem:[#allocation5 + $0xe8] sm:$0xff]
    %v1466 = vld [vmem:[#allocation5 + $0xf0] sm:$0xff]
    %v1467 = vld [vmem:[#allocation5 + $0xf8] sm:$0xff]
    %v1468 = vld [vmem:[#allocation5 + $0x100] sm:$0xff]
    %v1469 = vld [vmem:[#allocation5 + $0x108] sm:$0xff]
    %v1470 = vld [vmem:[#allocation5 + $0x110] sm:$0xff]
    %v1471 = vld [vmem:[#allocation5 + $0x118] sm:$0xff]
    %v1472 = vld [vmem:[#allocation5 + $0x120] sm:$0xff]
    %v1473 = vld [vmem:[#allocation5 + $0x128] sm:$0xff]
    %v1474 = vld [vmem:[#allocation5 + $0x130] sm:$0xff]
    %v1475 = vld [vmem:[#allocation5 + $0x138] sm:$0xff]
    %v1476 = vld [vmem:[#allocation5 + $0x140] sm:$0xff]
    %v1477 = vld [vmem:[#allocation5 + $0x148] sm:$0xff]
    %v1478 = vld [vmem:[#allocation5 + $0x150] sm:$0xff]
    %v1479 = vld [vmem:[#allocation5 + $0x158] sm:$0xff]
    %v1480 = vld [vmem:[#allocation5 + $0x160] sm:$0xff]
    %v1481 = vld [vmem:[#allocation5 + $0x168] sm:$0xff]
    %v1482 = vld [vmem:[#allocation5 + $0x170] sm:$0xff]
    %v1483 = vld [vmem:[#allocation5 + $0x178] sm:$0xff]
    %v1484 = vld [vmem:[#allocation5 + $0x180] sm:$0xff]
    %v1485 = vld [vmem:[#allocation5 + $0x188] sm:$0xff]
    %v1486 = vld [vmem:[#allocation5 + $0x190] sm:$0xff]
    %v1487 = vld [vmem:[#allocation5 + $0x198] sm:$0xff]
    %v1488 = vld [vmem:[#allocation5 + $0x1a0] sm:$0xff]
    %v1489 = vld [vmem:[#allocation5 + $0x1a8] sm:$0xff]
    %v1490 = vld [vmem:[#allocation5 + $0x1b0] sm:$0xff]
    %v1491 = vld [vmem:[#allocation5 + $0x1b8] sm:$0xff]
    %v1492 = vld [vmem:[#allocation5 + $0x1c0] sm:$0xff]
    %v1493 = vld [vmem:[#allocation5 + $0x1c8] sm:$0xff]
    %v1494 = vld [vmem:[#allocation5 + $0x1d0] sm:$0xff]
    %v1495 = vld [vmem:[#allocation5 + $0x1d8] sm:$0xff]
    %v1496 = vld [vmem:[#allocation5 + $0x1e0] sm:$0xff]
    %v1497 = vld [vmem:[#allocation5 + $0x1e8] sm:$0xff]
    %v1498 = vld [vmem:[#allocation5 + $0x1f0] sm:$0xff]
    %v1499 = vld [vmem:[#allocation5 + $0x1f8] sm:$0xff]
    %v1500 = vld [vmem:[#allocation5 + $0x200] sm:$0xff]
    %v1501 = vld [vmem:[#allocation5 + $0x208] sm:$0xff]
    %v1502 = vld [vmem:[#allocation5 + $0x210] sm:$0xff]
    %v1503 = vld [vmem:[#allocation5 + $0x218] sm:$0xff]
    %v1504 = vld [vmem:[#allocation5 + $0x220] sm:$0xff]
    %v1505 = vld [vmem:[#allocation5 + $0x228] sm:$0xff]
    %v1506 = vld [vmem:[#allocation5 + $0x230] sm:$0xff]
    %v1507 = vld [vmem:[#allocation5 + $0x238] sm:$0xff]
    %v1508 = vld [vmem:[#allocation5 + $0x240] sm:$0xff]
    %v1509 = vld [vmem:[#allocation5 + $0x248] sm:$0xff]
    %v1510 = vld [vmem:[#allocation5 + $0x250] sm:$0xff]
    %v1511 = vld [vmem:[#allocation5 + $0x258] sm:$0xff]
    %v1512 = vld [vmem:[#allocation5 + $0x260] sm:$0xff]
    %v1513 = vld [vmem:[#allocation5 + $0x268] sm:$0xff]
    %v1514 = vld [vmem:[#allocation5 + $0x270] sm:$0xff]
    %v1515 = vld [vmem:[#allocation5 + $0x278] sm:$0xff]
    %v1516 = vld [vmem:[#allocation5 + $0x280] sm:$0xff]
    %v1517 = vld [vmem:[#allocation5 + $0x288] sm:$0xff]
    %v1518 = vld [vmem:[#allocation5 + $0x290] sm:$0xff]
    %v1519 = vld [vmem:[#allocation5 + $0x298] sm:$0xff]
    %v1520 = vld [vmem:[#allocation5 + $0x2a0] sm:$0xff]
    %v1521 = vld [vmem:[#allocation5 + $0x2a8] sm:$0xff]
    %v1522 = vld [vmem:[#allocation5 + $0x2b0] sm:$0xff]
    %v1523 = vld [vmem:[#allocation5 + $0x2b8] sm:$0xff]
    %v1524 = vld [vmem:[#allocation5 + $0x2c0] sm:$0xff]
    %v1525 = vld [vmem:[#allocation5 + $0x2c8] sm:$0xff]
    %v1526 = vld [vmem:[#allocation5 + $0x2d0] sm:$0xff]
    %v1527 = vld [vmem:[#allocation5 + $0x2d8] sm:$0xff]
    %v1528 = vld [vmem:[#allocation5 + $0x2e0] sm:$0xff]
    %v1529 = vld [vmem:[#allocation5 + $0x2e8] sm:$0xff]
    %v1530 = vld [vmem:[#allocation5 + $0x2f0] sm:$0xff]
    %v1531 = vld [vmem:[#allocation5 + $0x2f8] sm:$0xff]
    %v1532 = vld [vmem:[#allocation5 + $0x300] sm:$0xff]
    %v1533 = vld [vmem:[#allocation5 + $0x308] sm:$0xff]
    %v1534 = vld [vmem:[#allocation5 + $0x310] sm:$0xff]
    %v1535 = vld [vmem:[#allocation5 + $0x318] sm:$0xff]
    %v1536 = vld [vmem:[#allocation5 + $0x320] sm:$0xff]
    %v1537 = vld [vmem:[#allocation5 + $0x328] sm:$0xff]
    %v1538 = vld [vmem:[#allocation5 + $0x330] sm:$0xff]
    %v1539 = vld [vmem:[#allocation5 + $0x338] sm:$0xff]
    %v1540 = vld [vmem:[#allocation5 + $0x340] sm:$0xff]
    %v1541 = vld [vmem:[#allocation5 + $0x348] sm:$0xff]
    %v1542 = vld [vmem:[#allocation5 + $0x350] sm:$0xff]
    %v1543 = vld [vmem:[#allocation5 + $0x358] sm:$0xff]
    %v1544 = vld [vmem:[#allocation5 + $0x360] sm:$0xff]
    %v1545 = vld [vmem:[#allocation5 + $0x368] sm:$0xff]
    %v1546 = vld [vmem:[#allocation5 + $0x370] sm:$0xff]
    %v1547 = vld [vmem:[#allocation5 + $0x378] sm:$0xff]
    %v1548 = vld [vmem:[#allocation5 + $0x380] sm:$0xff]
    %v1549 = vld [vmem:[#allocation5 + $0x388] sm:$0xff]
    %v1550 = vld [vmem:[#allocation5 + $0x390] sm:$0xff]
    %v1551 = vld [vmem:[#allocation5 + $0x398] sm:$0xff]
    %v1552 = vld [vmem:[#allocation5 + $0x3a0] sm:$0xff]
    %v1553 = vld [vmem:[#allocation5 + $0x3a8] sm:$0xff]
    %v1554 = vld [vmem:[#allocation5 + $0x3b0] sm:$0xff]
    %v1555 = vld [vmem:[#allocation5 + $0x3b8] sm:$0xff]
    %v1556 = vld [vmem:[#allocation5 + $0x3c0] sm:$0xff]
    %v1557 = vld [vmem:[#allocation5 + $0x3c8] sm:$0xff]
    %v1558 = vld [vmem:[#allocation5 + $0x3d0] sm:$0xff]
    %v1559 = vld [vmem:[#allocation5 + $0x3d8] sm:$0xff]
    %v1560 = vld [vmem:[#allocation5 + $0x3e0] sm:$0xff]
    %v1561 = vld [vmem:[#allocation5 + $0x3e8] sm:$0xff]
    %v1562 = vld [vmem:[#allocation5 + $0x3f0] sm:$0xff]
    %v1563 = vld [vmem:[#allocation5 + $0x3f8] sm:$0xff]
    %v1564 = vld [vmem:[%s12] sm:$0xff]
    %v1566 = vperm.slane %v1564, 0
    %v1567 = vperm.slane %v1564, 1
    %v1568 = vperm.slane %v1564, 2
    %v1569 = vperm.slane %v1564, 3
    %v1570 = vperm.slane %v1564, 4
    %v1571 = vperm.slane %v1564, 5
    %v1572 = vperm.slane %v1564, 6
    %v1573 = vperm.slane %v1564, 7
    %v1710 = vunpack.c.l.b16 %v1436
    %v1711 = vunpack.c.h.b16 %v1436
    %v1712 = vunpack.c.l.b16 %v1437
    %v1713 = vunpack.c.h.b16 %v1437
    %v1714 = vunpack.c.l.b16 %v1438
    %v1715 = vunpack.c.h.b16 %v1438
    %v1716 = vunpack.c.l.b16 %v1439
    %v1717 = vunpack.c.h.b16 %v1439
    %v1718 = vunpack.c.l.b16 %v1440
    %v1719 = vunpack.c.h.b16 %v1440
    %v1720 = vunpack.c.l.b16 %v1441
    %v1721 = vunpack.c.h.b16 %v1441
    %v1722 = vunpack.c.l.b16 %v1442
    %v1723 = vunpack.c.h.b16 %v1442
    %v1724 = vunpack.c.l.b16 %v1443
    %v1725 = vunpack.c.h.b16 %v1443
    %v1726 = vunpack.c.l.b16 %v1444
    %v1727 = vunpack.c.h.b16 %v1444
    %v1728 = vunpack.c.l.b16 %v1445
    %v1729 = vunpack.c.h.b16 %v1445
    %v1730 = vunpack.c.l.b16 %v1446
    %v1731 = vunpack.c.h.b16 %v1446
    %v1732 = vunpack.c.l.b16 %v1447
    %v1733 = vunpack.c.h.b16 %v1447
    %v1734 = vunpack.c.l.b16 %v1448
    %v1735 = vunpack.c.h.b16 %v1448
    %v1736 = vunpack.c.l.b16 %v1449
    %v1737 = vunpack.c.h.b16 %v1449
    %v1738 = vunpack.c.l.b16 %v1450
    %v1739 = vunpack.c.h.b16 %v1450
    %v1740 = vunpack.c.l.b16 %v1451
    %v1741 = vunpack.c.h.b16 %v1451
    %v1742 = vunpack.c.l.b16 %v1452
    %v1743 = vunpack.c.h.b16 %v1452
    %v1744 = vunpack.c.l.b16 %v1453
    %v1745 = vunpack.c.h.b16 %v1453
    %v1746 = vunpack.c.l.b16 %v1454
    %v1747 = vunpack.c.h.b16 %v1454
    %v1748 = vunpack.c.l.b16 %v1455
    %v1749 = vunpack.c.h.b16 %v1455
    %v1750 = vunpack.c.l.b16 %v1456
    %v1751 = vunpack.c.h.b16 %v1456
    %v1752 = vunpack.c.l.b16 %v1457
    %v1753 = vunpack.c.h.b16 %v1457
    %v1754 = vunpack.c.l.b16 %v1458
    %v1755 = vunpack.c.h.b16 %v1458
    %v1756 = vunpack.c.l.b16 %v1459
    %v1757 = vunpack.c.h.b16 %v1459
    %v1758 = vunpack.c.l.b16 %v1460
    %v1759 = vunpack.c.h.b16 %v1460
    %v1760 = vunpack.c.l.b16 %v1461
    %v1761 = vunpack.c.h.b16 %v1461
    %v1762 = vunpack.c.l.b16 %v1462
    %v1763 = vunpack.c.h.b16 %v1462
    %v1764 = vunpack.c.l.b16 %v1463
    %v1765 = vunpack.c.h.b16 %v1463
    %v1766 = vunpack.c.l.b16 %v1464
    %v1767 = vunpack.c.h.b16 %v1464
    %v1768 = vunpack.c.l.b16 %v1465
    %v1769 = vunpack.c.h.b16 %v1465
    %v1770 = vunpack.c.l.b16 %v1466
    %v1771 = vunpack.c.h.b16 %v1466
    %v1772 = vunpack.c.l.b16 %v1467
    %v1773 = vunpack.c.h.b16 %v1467
    %v1774 = vunpack.c.l.b16 %v1468
    %v1775 = vunpack.c.h.b16 %v1468
    %v1776 = vunpack.c.l.b16 %v1469
    %v1777 = vunpack.c.h.b16 %v1469
    %v1778 = vunpack.c.l.b16 %v1470
    %v1779 = vunpack.c.h.b16 %v1470
    %v1780 = vunpack.c.l.b16 %v1471
    %v1781 = vunpack.c.h.b16 %v1471
    %v1782 = vunpack.c.l.b16 %v1472
    %v1783 = vunpack.c.h.b16 %v1472
    %v1784 = vunpack.c.l.b16 %v1473
    %v1785 = vunpack.c.h.b16 %v1473
    %v1786 = vunpack.c.l.b16 %v1474
    %v1787 = vunpack.c.h.b16 %v1474
    %v1788 = vunpack.c.l.b16 %v1475
    %v1789 = vunpack.c.h.b16 %v1475
    %v1790 = vunpack.c.l.b16 %v1476
    %v1791 = vunpack.c.h.b16 %v1476
    %v1792 = vunpack.c.l.b16 %v1477
    %v1793 = vunpack.c.h.b16 %v1477
    %v1794 = vunpack.c.l.b16 %v1478
    %v1795 = vunpack.c.h.b16 %v1478
    %v1796 = vunpack.c.l.b16 %v1479
    %v1797 = vunpack.c.h.b16 %v1479
    %v1798 = vunpack.c.l.b16 %v1480
    %v1799 = vunpack.c.h.b16 %v1480
    %v1800 = vunpack.c.l.b16 %v1481
    %v1801 = vunpack.c.h.b16 %v1481
    %v1802 = vunpack.c.l.b16 %v1482
    %v1803 = vunpack.c.h.b16 %v1482
    %v1804 = vunpack.c.l.b16 %v1483
    %v1805 = vunpack.c.h.b16 %v1483
    %v1806 = vunpack.c.l.b16 %v1484
    %v1807 = vunpack.c.h.b16 %v1484
    %v1808 = vunpack.c.l.b16 %v1485
    %v1809 = vunpack.c.h.b16 %v1485
    %v1810 = vunpack.c.l.b16 %v1486
    %v1811 = vunpack.c.h.b16 %v1486
    %v1812 = vunpack.c.l.b16 %v1487
    %v1813 = vunpack.c.h.b16 %v1487
    %v1814 = vunpack.c.l.b16 %v1488
    %v1815 = vunpack.c.h.b16 %v1488
    %v1816 = vunpack.c.l.b16 %v1489
    %v1817 = vunpack.c.h.b16 %v1489
    %v1818 = vunpack.c.l.b16 %v1490
    %v1819 = vunpack.c.h.b16 %v1490
    %v1820 = vunpack.c.l.b16 %v1491
    %v1821 = vunpack.c.h.b16 %v1491
    %v1822 = vunpack.c.l.b16 %v1492
    %v1823 = vunpack.c.h.b16 %v1492
    %v1824 = vunpack.c.l.b16 %v1493
    %v1825 = vunpack.c.h.b16 %v1493
    %v1826 = vunpack.c.l.b16 %v1494
    %v1827 = vunpack.c.h.b16 %v1494
    %v1828 = vunpack.c.l.b16 %v1495
    %v1829 = vunpack.c.h.b16 %v1495
    %v1830 = vunpack.c.l.b16 %v1496
    %v1831 = vunpack.c.h.b16 %v1496
    %v1832 = vunpack.c.l.b16 %v1497
    %v1833 = vunpack.c.h.b16 %v1497
    %v1834 = vunpack.c.l.b16 %v1498
    %v1835 = vunpack.c.h.b16 %v1498
    %v1836 = vunpack.c.l.b16 %v1499
    %v1837 = vunpack.c.h.b16 %v1499
    %v1838 = vunpack.c.l.b16 %v1500
    %v1839 = vunpack.c.h.b16 %v1500
    %v1840 = vunpack.c.l.b16 %v1501
    %v1841 = vunpack.c.h.b16 %v1501
    %v1842 = vunpack.c.l.b16 %v1502
    %v1843 = vunpack.c.h.b16 %v1502
    %v1844 = vunpack.c.l.b16 %v1503
    %v1845 = vunpack.c.h.b16 %v1503
    %v1846 = vunpack.c.l.b16 %v1504
    %v1847 = vunpack.c.h.b16 %v1504
    %v1848 = vunpack.c.l.b16 %v1505
    %v1849 = vunpack.c.h.b16 %v1505
    %v1850 = vunpack.c.l.b16 %v1506
    %v1851 = vunpack.c.h.b16 %v1506
    %v1852 = vunpack.c.l.b16 %v1507
    %v1853 = vunpack.c.h.b16 %v1507
    %v1854 = vunpack.c.l.b16 %v1508
    %v1855 = vunpack.c.h.b16 %v1508
    %v1856 = vunpack.c.l.b16 %v1509
    %v1857 = vunpack.c.h.b16 %v1509
    %v1858 = vunpack.c.l.b16 %v1510
    %v1859 = vunpack.c.h.b16 %v1510
    %v1860 = vunpack.c.l.b16 %v1511
    %v1861 = vunpack.c.h.b16 %v1511
    %v1862 = vunpack.c.l.b16 %v1512
    %v1863 = vunpack.c.h.b16 %v1512
    %v1864 = vunpack.c.l.b16 %v1513
    %v1865 = vunpack.c.h.b16 %v1513
    %v1866 = vunpack.c.l.b16 %v1514
    %v1867 = vunpack.c.h.b16 %v1514
    %v1868 = vunpack.c.l.b16 %v1515
    %v1869 = vunpack.c.h.b16 %v1515
    %v1870 = vunpack.c.l.b16 %v1516
    %v1871 = vunpack.c.h.b16 %v1516
    %v1872 = vunpack.c.l.b16 %v1517
    %v1873 = vunpack.c.h.b16 %v1517
    %v1874 = vunpack.c.l.b16 %v1518
    %v1875 = vunpack.c.h.b16 %v1518
    %v1876 = vunpack.c.l.b16 %v1519
    %v1877 = vunpack.c.h.b16 %v1519
    %v1878 = vunpack.c.l.b16 %v1520
    %v1879 = vunpack.c.h.b16 %v1520
    %v1880 = vunpack.c.l.b16 %v1521
    %v1881 = vunpack.c.h.b16 %v1521
    %v1882 = vunpack.c.l.b16 %v1522
    %v1883 = vunpack.c.h.b16 %v1522
    %v1884 = vunpack.c.l.b16 %v1523
    %v1885 = vunpack.c.h.b16 %v1523
    %v1886 = vunpack.c.l.b16 %v1524
    %v1887 = vunpack.c.h.b16 %v1524
    %v1888 = vunpack.c.l.b16 %v1525
    %v1889 = vunpack.c.h.b16 %v1525
    %v1890 = vunpack.c.l.b16 %v1526
    %v1891 = vunpack.c.h.b16 %v1526
    %v1892 = vunpack.c.l.b16 %v1527
    %v1893 = vunpack.c.h.b16 %v1527
    %v1894 = vunpack.c.l.b16 %v1528
    %v1895 = vunpack.c.h.b16 %v1528
    %v1896 = vunpack.c.l.b16 %v1529
    %v1897 = vunpack.c.h.b16 %v1529
    %v1898 = vunpack.c.l.b16 %v1530
    %v1899 = vunpack.c.h.b16 %v1530
    %v1900 = vunpack.c.l.b16 %v1531
    %v1901 = vunpack.c.h.b16 %v1531
    %v1902 = vunpack.c.l.b16 %v1532
    %v1903 = vunpack.c.h.b16 %v1532
    %v1904 = vunpack.c.l.b16 %v1533
    %v1905 = vunpack.c.h.b16 %v1533
    %v1906 = vunpack.c.l.b16 %v1534
    %v1907 = vunpack.c.h.b16 %v1534
    %v1908 = vunpack.c.l.b16 %v1535
    %v1909 = vunpack.c.h.b16 %v1535
    %v1910 = vunpack.c.l.b16 %v1536
    %v1911 = vunpack.c.h.b16 %v1536
    %v1912 = vunpack.c.l.b16 %v1537
    %v1913 = vunpack.c.h.b16 %v1537
    %v1914 = vunpack.c.l.b16 %v1538
    %v1915 = vunpack.c.h.b16 %v1538
    %v1916 = vunpack.c.l.b16 %v1539
    %v1917 = vunpack.c.h.b16 %v1539
    %v1918 = vunpack.c.l.b16 %v1540
    %v1919 = vunpack.c.h.b16 %v1540
    %v1920 = vunpack.c.l.b16 %v1541
    %v1921 = vunpack.c.h.b16 %v1541
    %v1922 = vunpack.c.l.b16 %v1542
    %v1923 = vunpack.c.h.b16 %v1542
    %v1924 = vunpack.c.l.b16 %v1543
    %v1925 = vunpack.c.h.b16 %v1543
    %v1926 = vunpack.c.l.b16 %v1544
    %v1927 = vunpack.c.h.b16 %v1544
    %v1928 = vunpack.c.l.b16 %v1545
    %v1929 = vunpack.c.h.b16 %v1545
    %v1930 = vunpack.c.l.b16 %v1546
    %v1931 = vunpack.c.h.b16 %v1546
    %v1932 = vunpack.c.l.b16 %v1547
    %v1933 = vunpack.c.h.b16 %v1547
    %v1934 = vunpack.c.l.b16 %v1548
    %v1935 = vunpack.c.h.b16 %v1548
    %v1936 = vunpack.c.l.b16 %v1549
    %v1937 = vunpack.c.h.b16 %v1549
    %v1938 = vunpack.c.l.b16 %v1550
    %v1939 = vunpack.c.h.b16 %v1550
    %v1940 = vunpack.c.l.b16 %v1551
    %v1941 = vunpack.c.h.b16 %v1551
    %v1942 = vunpack.c.l.b16 %v1552
    %v1943 = vunpack.c.h.b16 %v1552
    %v1944 = vunpack.c.l.b16 %v1553
    %v1945 = vunpack.c.h.b16 %v1553
    %v1946 = vunpack.c.l.b16 %v1554
    %v1947 = vunpack.c.h.b16 %v1554
    %v1948 = vunpack.c.l.b16 %v1555
    %v1949 = vunpack.c.h.b16 %v1555
    %v1950 = vunpack.c.l.b16 %v1556
    %v1951 = vunpack.c.h.b16 %v1556
    %v1952 = vunpack.c.l.b16 %v1557
    %v1953 = vunpack.c.h.b16 %v1557
    %v1954 = vunpack.c.l.b16 %v1558
    %v1955 = vunpack.c.h.b16 %v1558
    %v1956 = vunpack.c.l.b16 %v1559
    %v1957 = vunpack.c.h.b16 %v1559
    %v1958 = vunpack.c.l.b16 %v1560
    %v1959 = vunpack.c.h.b16 %v1560
    %v1960 = vunpack.c.l.b16 %v1561
    %v1961 = vunpack.c.h.b16 %v1561
    %v1962 = vunpack.c.l.b16 %v1562
    %v1963 = vunpack.c.h.b16 %v1562
    %v1964 = vunpack.c.l.b16 %v1563
    %v1965 = vunpack.c.h.b16 %v1563
    %v1966 = vpack.c.b16 %v1718, %v1710
    %v1967 = vpack.c.b16 %v1719, %v1711
    %v1968 = vpack.c.b16 %v1720, %v1712
    %v1969 = vpack.c.b16 %v1721, %v1713
    %v1970 = vpack.c.b16 %v1722, %v1714
    %v1971 = vpack.c.b16 %v1723, %v1715
    %v1972 = vpack.c.b16 %v1724, %v1716
    %v1973 = vpack.c.b16 %v1725, %v1717
    %v1974 = vpack.c.b16 %v1734, %v1726
    %v1975 = vpack.c.b16 %v1735, %v1727
    %v1976 = vpack.c.b16 %v1736, %v1728
    %v1977 = vpack.c.b16 %v1737, %v1729
    %v1978 = vpack.c.b16 %v1738, %v1730
    %v1979 = vpack.c.b16 %v1739, %v1731
    %v1980 = vpack.c.b16 %v1740, %v1732
    %v1981 = vpack.c.b16 %v1741, %v1733
    %v1982 = vpack.c.b16 %v1750, %v1742
    %v1983 = vpack.c.b16 %v1751, %v1743
    %v1984 = vpack.c.b16 %v1752, %v1744
    %v1985 = vpack.c.b16 %v1753, %v1745
    %v1986 = vpack.c.b16 %v1754, %v1746
    %v1987 = vpack.c.b16 %v1755, %v1747
    %v1988 = vpack.c.b16 %v1756, %v1748
    %v1989 = vpack.c.b16 %v1757, %v1749
    %v1990 = vpack.c.b16 %v1766, %v1758
    %v1991 = vpack.c.b16 %v1767, %v1759
    %v1992 = vpack.c.b16 %v1768, %v1760
    %v1993 = vpack.c.b16 %v1769, %v1761
    %v1994 = vpack.c.b16 %v1770, %v1762
    %v1995 = vpack.c.b16 %v1771, %v1763
    %v1996 = vpack.c.b16 %v1772, %v1764
    %v1997 = vpack.c.b16 %v1773, %v1765
    %v1998 = vpack.c.b16 %v1782, %v1774
    %v1999 = vpack.c.b16 %v1783, %v1775
    %v2000 = vpack.c.b16 %v1784, %v1776
    %v2001 = vpack.c.b16 %v1785, %v1777
    %v2002 = vpack.c.b16 %v1786, %v1778
    %v2003 = vpack.c.b16 %v1787, %v1779
    %v2004 = vpack.c.b16 %v1788, %v1780
    %v2005 = vpack.c.b16 %v1789, %v1781
    %v2006 = vpack.c.b16 %v1798, %v1790
    %v2007 = vpack.c.b16 %v1799, %v1791
    %v2008 = vpack.c.b16 %v1800, %v1792
    %v2009 = vpack.c.b16 %v1801, %v1793
    %v2010 = vpack.c.b16 %v1802, %v1794
    %v2011 = vpack.c.b16 %v1803, %v1795
    %v2012 = vpack.c.b16 %v1804, %v1796
    %v2013 = vpack.c.b16 %v1805, %v1797
    %v2014 = vpack.c.b16 %v1814, %v1806
    %v2015 = vpack.c.b16 %v1815, %v1807
    %v2016 = vpack.c.b16 %v1816, %v1808
    %v2017 = vpack.c.b16 %v1817, %v1809
    %v2018 = vpack.c.b16 %v1818, %v1810
    %v2019 = vpack.c.b16 %v1819, %v1811
    %v2020 = vpack.c.b16 %v1820, %v1812
    %v2021 = vpack.c.b16 %v1821, %v1813
    %v2022 = vpack.c.b16 %v1830, %v1822
    %v2023 = vpack.c.b16 %v1831, %v1823
    %v2024 = vpack.c.b16 %v1832, %v1824
    %v2025 = vpack.c.b16 %v1833, %v1825
    %v2026 = vpack.c.b16 %v1834, %v1826
    %v2027 = vpack.c.b16 %v1835, %v1827
    %v2028 = vpack.c.b16 %v1836, %v1828
    %v2029 = vpack.c.b16 %v1837, %v1829
    %v2030 = vpack.c.b16 %v1846, %v1838
    %v2031 = vpack.c.b16 %v1847, %v1839
    %v2032 = vpack.c.b16 %v1848, %v1840
    %v2033 = vpack.c.b16 %v1849, %v1841
    %v2034 = vpack.c.b16 %v1850, %v1842
    %v2035 = vpack.c.b16 %v1851, %v1843
    %v2036 = vpack.c.b16 %v1852, %v1844
    %v2037 = vpack.c.b16 %v1853, %v1845
    %v2038 = vpack.c.b16 %v1862, %v1854
    %v2039 = vpack.c.b16 %v1863, %v1855
    %v2040 = vpack.c.b16 %v1864, %v1856
    %v2041 = vpack.c.b16 %v1865, %v1857
    %v2042 = vpack.c.b16 %v1866, %v1858
    %v2043 = vpack.c.b16 %v1867, %v1859
    %v2044 = vpack.c.b16 %v1868, %v1860
    %v2045 = vpack.c.b16 %v1869, %v1861
    %v2046 = vpack.c.b16 %v1878, %v1870
    %v2047 = vpack.c.b16 %v1879, %v1871
    %v2048 = vpack.c.b16 %v1880, %v1872
    %v2049 = vpack.c.b16 %v1881, %v1873
    %v2050 = vpack.c.b16 %v1882, %v1874
    %v2051 = vpack.c.b16 %v1883, %v1875
    %v2052 = vpack.c.b16 %v1884, %v1876
    %v2053 = vpack.c.b16 %v1885, %v1877
    %v2054 = vpack.c.b16 %v1894, %v1886
    %v2055 = vpack.c.b16 %v1895, %v1887
    %v2056 = vpack.c.b16 %v1896, %v1888
    %v2057 = vpack.c.b16 %v1897, %v1889
    %v2058 = vpack.c.b16 %v1898, %v1890
    %v2059 = vpack.c.b16 %v1899, %v1891
    %v2060 = vpack.c.b16 %v1900, %v1892
    %v2061 = vpack.c.b16 %v1901, %v1893
    %v2062 = vpack.c.b16 %v1910, %v1902
    %v2063 = vpack.c.b16 %v1911, %v1903
    %v2064 = vpack.c.b16 %v1912, %v1904
    %v2065 = vpack.c.b16 %v1913, %v1905
    %v2066 = vpack.c.b16 %v1914, %v1906
    %v2067 = vpack.c.b16 %v1915, %v1907
    %v2068 = vpack.c.b16 %v1916, %v1908
    %v2069 = vpack.c.b16 %v1917, %v1909
    %v2070 = vpack.c.b16 %v1926, %v1918
    %v2071 = vpack.c.b16 %v1927, %v1919
    %v2072 = vpack.c.b16 %v1928, %v1920
    %v2073 = vpack.c.b16 %v1929, %v1921
    %v2074 = vpack.c.b16 %v1930, %v1922
    %v2075 = vpack.c.b16 %v1931, %v1923
    %v2076 = vpack.c.b16 %v1932, %v1924
    %v2077 = vpack.c.b16 %v1933, %v1925
    %v2078 = vpack.c.b16 %v1942, %v1934
    %v2079 = vpack.c.b16 %v1943, %v1935
    %v2080 = vpack.c.b16 %v1944, %v1936
    %v2081 = vpack.c.b16 %v1945, %v1937
    %v2082 = vpack.c.b16 %v1946, %v1938
    %v2083 = vpack.c.b16 %v1947, %v1939
    %v2084 = vpack.c.b16 %v1948, %v1940
    %v2085 = vpack.c.b16 %v1949, %v1941
    %v2086 = vpack.c.b16 %v1958, %v1950
    %v2087 = vpack.c.b16 %v1959, %v1951
    %v2088 = vpack.c.b16 %v1960, %v1952
    %v2089 = vpack.c.b16 %v1961, %v1953
    %v2090 = vpack.c.b16 %v1962, %v1954
    %v2091 = vpack.c.b16 %v1963, %v1955
    %v2092 = vpack.c.b16 %v1964, %v1956
    %v2093 = vpack.c.b16 %v1965, %v1957
    %2222 = vmatpush.bf16.msra.mxu0 %v2022
    %2223 = vmatpush.bf16.msra.mxu0 %v2014
    %2224 = vmatpush.bf16.msra.mxu0 %v2006
    %2225 = vmatpush.bf16.msra.mxu0 %v1998
    %2226 = vmatpush.bf16.msra.mxu0 %v1990
    %2227 = vmatpush.bf16.msra.mxu0 %v1982
    %2228 = vmatpush.bf16.msra.mxu0 %v1974
    %2229 = vmatpush.bf16.msra.mxu0 %v1966
    %2230 = vmatmul.bf16.gmra.mxu0 %v1434
    %v2231 = vpop.f32.mrf.mxu0
    %v2232 = vadd.f32 %v1566, %v2231
    %v2233 = vpop.f32.mrf.mxu0
    %2234 = vdwg.mxu0
    %2235 = vmatpush.bf16.msra.mxu0 %v2086
    %2236 = vmatpush.bf16.msra.mxu0 %v2078
    %2237 = vmatpush.bf16.msra.mxu0 %v2070
    %2238 = vmatpush.bf16.msra.mxu0 %v2062
    %2239 = vmatpush.bf16.msra.mxu0 %v2054
    %2240 = vmatpush.bf16.msra.mxu0 %v2046
    %2241 = vmatpush.bf16.msra.mxu0 %v2038
    %2242 = vmatpush.bf16.msra.mxu0 %v2030
    %2243 = vmatmul.bf16.gmra.mxu0 %v1435
    %v2244 = vpop.f32.mrf.mxu0
    %v2245 = vadd.f32 %v2232, %v2244
    %v2246 = vpop.f32.mrf.mxu0
    %2247 = vdwg.mxu0
    %2248 = vmatpush.bf16.msra.mxu0 %v2023
    %2249 = vmatpush.bf16.msra.mxu0 %v2015
    %2250 = vmatpush.bf16.msra.mxu0 %v2007
    %2251 = vmatpush.bf16.msra.mxu0 %v1999
    %2252 = vmatpush.bf16.msra.mxu0 %v1991
    %2253 = vmatpush.bf16.msra.mxu0 %v1983
    %2254 = vmatpush.bf16.msra.mxu0 %v1975
    %2255 = vmatpush.bf16.msra.mxu0 %v1967
    %2256 = vmatmul.bf16.gmra.mxu0 %v1434
    %v2257 = vpop.f32.mrf.mxu0
    %v2258 = vadd.f32 %v1567, %v2257
    %v2259 = vpop.f32.mrf.mxu0
    %2260 = vdwg.mxu0
    %2261 = vmatpush.bf16.msra.mxu0 %v2087
    %2262 = vmatpush.bf16.msra.mxu0 %v2079
    %2263 = vmatpush.bf16.msra.mxu0 %v2071
    %2264 = vmatpush.bf16.msra.mxu0 %v2063
    %2265 = vmatpush.bf16.msra.mxu0 %v2055
    %2266 = vmatpush.bf16.msra.mxu0 %v2047
    %2267 = vmatpush.bf16.msra.mxu0 %v2039
    %2268 = vmatpush.bf16.msra.mxu0 %v2031
    %2269 = vmatmul.bf16.gmra.mxu0 %v1435
    %v2270 = vpop.f32.mrf.mxu0
    %v2271 = vadd.f32 %v2258, %v2270
    %v2272 = vpop.f32.mrf.mxu0
    %2273 = vdwg.mxu0
    %2274 = vmatpush.bf16.msra.mxu0 %v2024
    %2275 = vmatpush.bf16.msra.mxu0 %v2016
    %2276 = vmatpush.bf16.msra.mxu0 %v2008
    %2277 = vmatpush.bf16.msra.mxu0 %v2000
    %2278 = vmatpush.bf16.msra.mxu0 %v1992
    %2279 = vmatpush.bf16.msra.mxu0 %v1984
    %2280 = vmatpush.bf16.msra.mxu0 %v1976
    %2281 = vmatpush.bf16.msra.mxu0 %v1968
    %2282 = vmatmul.bf16.gmra.mxu0 %v1434
    %v2283 = vpop.f32.mrf.mxu0
    %v2284 = vadd.f32 %v1568, %v2283
    %v2285 = vpop.f32.mrf.mxu0
    %2286 = vdwg.mxu0
    %2287 = vmatpush.bf16.msra.mxu0 %v2088
    %2288 = vmatpush.bf16.msra.mxu0 %v2080
    %2289 = vmatpush.bf16.msra.mxu0 %v2072
    %2290 = vmatpush.bf16.msra.mxu0 %v2064
    %2291 = vmatpush.bf16.msra.mxu0 %v2056
    %2292 = vmatpush.bf16.msra.mxu0 %v2048
    %2293 = vmatpush.bf16.msra.mxu0 %v2040
    %2294 = vmatpush.bf16.msra.mxu0 %v2032
    %2295 = vmatmul.bf16.gmra.mxu0 %v1435
    %v2296 = vpop.f32.mrf.mxu0
    %v2297 = vadd.f32 %v2284, %v2296
    %v2298 = vpop.f32.mrf.mxu0
    %2299 = vdwg.mxu0
    %2300 = vmatpush.bf16.msra.mxu0 %v2025
    %2301 = vmatpush.bf16.msra.mxu0 %v2017
    %2302 = vmatpush.bf16.msra.mxu0 %v2009
    %2303 = vmatpush.bf16.msra.mxu0 %v2001
    %2304 = vmatpush.bf16.msra.mxu0 %v1993
    %2305 = vmatpush.bf16.msra.mxu0 %v1985
    %2306 = vmatpush.bf16.msra.mxu0 %v1977
    %2307 = vmatpush.bf16.msra.mxu0 %v1969
    %2308 = vmatmul.bf16.gmra.mxu0 %v1434
    %v2309 = vpop.f32.mrf.mxu0
    %v2310 = vadd.f32 %v1569, %v2309
    %v2311 = vpop.f32.mrf.mxu0
    %2312 = vdwg.mxu0
    %2313 = vmatpush.bf16.msra.mxu0 %v2089
    %2314 = vmatpush.bf16.msra.mxu0 %v2081
    %2315 = vmatpush.bf16.msra.mxu0 %v2073
    %2316 = vmatpush.bf16.msra.mxu0 %v2065
    %2317 = vmatpush.bf16.msra.mxu0 %v2057
    %2318 = vmatpush.bf16.msra.mxu0 %v2049
    %2319 = vmatpush.bf16.msra.mxu0 %v2041
    %2320 = vmatpush.bf16.msra.mxu0 %v2033
    %2321 = vmatmul.bf16.gmra.mxu0 %v1435
    %v2322 = vpop.f32.mrf.mxu0
    %v2323 = vadd.f32 %v2310, %v2322
    %v2324 = vpop.f32.mrf.mxu0
    %2325 = vdwg.mxu0
    %2326 = vmatpush.bf16.msra.mxu0 %v2026
    %2327 = vmatpush.bf16.msra.mxu0 %v2018
    %2328 = vmatpush.bf16.msra.mxu0 %v2010
    %2329 = vmatpush.bf16.msra.mxu0 %v2002
    %2330 = vmatpush.bf16.msra.mxu0 %v1994
    %2331 = vmatpush.bf16.msra.mxu0 %v1986
    %2332 = vmatpush.bf16.msra.mxu0 %v1978
    %2333 = vmatpush.bf16.msra.mxu0 %v1970
    %2334 = vmatmul.bf16.gmra.mxu0 %v1434
    %v2335 = vpop.f32.mrf.mxu0
    %v2336 = vadd.f32 %v1570, %v2335
    %v2337 = vpop.f32.mrf.mxu0
    %2338 = vdwg.mxu0
    %2339 = vmatpush.bf16.msra.mxu0 %v2090
    %2340 = vmatpush.bf16.msra.mxu0 %v2082
    %2341 = vmatpush.bf16.msra.mxu0 %v2074
    %2342 = vmatpush.bf16.msra.mxu0 %v2066
    %2343 = vmatpush.bf16.msra.mxu0 %v2058
    %2344 = vmatpush.bf16.msra.mxu0 %v2050
    %2345 = vmatpush.bf16.msra.mxu0 %v2042
    %2346 = vmatpush.bf16.msra.mxu0 %v2034
    %2347 = vmatmul.bf16.gmra.mxu0 %v1435
    %v2348 = vpop.f32.mrf.mxu0
    %v2349 = vadd.f32 %v2336, %v2348
    %v2350 = vpop.f32.mrf.mxu0
    %2351 = vdwg.mxu0
    %2352 = vmatpush.bf16.msra.mxu0 %v2027
    %2353 = vmatpush.bf16.msra.mxu0 %v2019
    %2354 = vmatpush.bf16.msra.mxu0 %v2011
    %2355 = vmatpush.bf16.msra.mxu0 %v2003
    %2356 = vmatpush.bf16.msra.mxu0 %v1995
    %2357 = vmatpush.bf16.msra.mxu0 %v1987
    %2358 = vmatpush.bf16.msra.mxu0 %v1979
    %2359 = vmatpush.bf16.msra.mxu0 %v1971
    %2360 = vmatmul.bf16.gmra.mxu0 %v1434
    %v2361 = vpop.f32.mrf.mxu0
    %v2362 = vadd.f32 %v1571, %v2361
    %v2363 = vpop.f32.mrf.mxu0
    %2364 = vdwg.mxu0
    %2365 = vmatpush.bf16.msra.mxu0 %v2091
    %2366 = vmatpush.bf16.msra.mxu0 %v2083
    %2367 = vmatpush.bf16.msra.mxu0 %v2075
    %2368 = vmatpush.bf16.msra.mxu0 %v2067
    %2369 = vmatpush.bf16.msra.mxu0 %v2059
    %2370 = vmatpush.bf16.msra.mxu0 %v2051
    %2371 = vmatpush.bf16.msra.mxu0 %v2043
    %2372 = vmatpush.bf16.msra.mxu0 %v2035
    %2373 = vmatmul.bf16.gmra.mxu0 %v1435
    %v2374 = vpop.f32.mrf.mxu0
    %v2375 = vadd.f32 %v2362, %v2374
    %v2376 = vpop.f32.mrf.mxu0
    %2377 = vdwg.mxu0
    %2378 = vmatpush.bf16.msra.mxu0 %v2028
    %2379 = vmatpush.bf16.msra.mxu0 %v2020
    %2380 = vmatpush.bf16.msra.mxu0 %v2012
    %2381 = vmatpush.bf16.msra.mxu0 %v2004
    %2382 = vmatpush.bf16.msra.mxu0 %v1996
    %2383 = vmatpush.bf16.msra.mxu0 %v1988
    %2384 = vmatpush.bf16.msra.mxu0 %v1980
    %2385 = vmatpush.bf16.msra.mxu0 %v1972
    %2386 = vmatmul.bf16.gmra.mxu0 %v1434
    %v2387 = vpop.f32.mrf.mxu0
    %v2388 = vadd.f32 %v1572, %v2387
    %v2389 = vpop.f32.mrf.mxu0
    %2390 = vdwg.mxu0
    %2391 = vmatpush.bf16.msra.mxu0 %v2092
    %2392 = vmatpush.bf16.msra.mxu0 %v2084
    %2393 = vmatpush.bf16.msra.mxu0 %v2076
    %2394 = vmatpush.bf16.msra.mxu0 %v2068
    %2395 = vmatpush.bf16.msra.mxu0 %v2060
    %2396 = vmatpush.bf16.msra.mxu0 %v2052
    %2397 = vmatpush.bf16.msra.mxu0 %v2044
    %2398 = vmatpush.bf16.msra.mxu0 %v2036
    %2399 = vmatmul.bf16.gmra.mxu0 %v1435
    %v2400 = vpop.f32.mrf.mxu0
    %v2401 = vadd.f32 %v2388, %v2400
    %v2402 = vpop.f32.mrf.mxu0
    %2403 = vdwg.mxu0
    %2404 = vmatpush.bf16.msra.mxu0 %v2029
    %2405 = vmatpush.bf16.msra.mxu0 %v2021
    %2406 = vmatpush.bf16.msra.mxu0 %v2013
    %2407 = vmatpush.bf16.msra.mxu0 %v2005
    %2408 = vmatpush.bf16.msra.mxu0 %v1997
    %2409 = vmatpush.bf16.msra.mxu0 %v1989
    %2410 = vmatpush.bf16.msra.mxu0 %v1981
    %2411 = vmatpush.bf16.msra.mxu0 %v1973
    %2412 = vmatmul.bf16.gmra.mxu0 %v1434
    %v2413 = vpop.f32.mrf.mxu0
    %v2414 = vadd.f32 %v1573, %v2413
    %v2415 = vpop.f32.mrf.mxu0
    %2416 = vdwg.mxu0
    %2417 = vmatpush.bf16.msra.mxu0 %v2093
    %2418 = vmatpush.bf16.msra.mxu0 %v2085
    %2419 = vmatpush.bf16.msra.mxu0 %v2077
    %2420 = vmatpush.bf16.msra.mxu0 %v2069
    %2421 = vmatpush.bf16.msra.mxu0 %v2061
    %2422 = vmatpush.bf16.msra.mxu0 %v2053
    %2423 = vmatpush.bf16.msra.mxu0 %v2045
    %2424 = vmatpush.bf16.msra.mxu0 %v2037
    %2425 = vmatmul.bf16.gmra.mxu0 %v1435
    %v2426 = vpop.f32.mrf.mxu0
    %v2427 = vadd.f32 %v2414, %v2426
    %v2428 = vpop.f32.mrf.mxu0
    %2429 = vdwg.mxu0
    %v2430 = vxor.u32 %v2245, 2147483648
    %v2431 = vxor.u32 %v2271, 2147483648
    %v2432 = vxor.u32 %v2297, 2147483648
    %v2433 = vxor.u32 %v2323, 2147483648
    %v2434 = vxor.u32 %v2349, 2147483648
    %v2435 = vxor.u32 %v2375, 2147483648
    %v2436 = vxor.u32 %v2401, 2147483648
    %v2437 = vxor.u32 %v2427, 2147483648
    %v2438 = vmul.f32 %v2430, 1.442695
    %v2439 = vpow.pop %v2438
    %v2440 = vmul.f32 %v2431, 1.442695
    %v2441 = vpow.pop %v2440
    %v2442 = vmul.f32 %v2432, 1.442695
    %v2443 = vpow.pop %v2442
    %v2444 = vmul.f32 %v2433, 1.442695
    %v2445 = vpow.pop %v2444
    %v2446 = vmul.f32 %v2434, 1.442695
    %v2447 = vpow.pop %v2446
    %v2448 = vmul.f32 %v2435, 1.442695
    %v2449 = vpow.pop %v2448
    %v2450 = vmul.f32 %v2436, 1.442695
    %v2451 = vpow.pop %v2450
    %v2452 = vmul.f32 %v2437, 1.442695
    %v2453 = vpow.pop %v2452
    %v2454 = vadd.f32 %v2439, 1.0
    %v2455 = vadd.f32 %v2441, 1.0
    %v2456 = vadd.f32 %v2443, 1.0
    %v2457 = vadd.f32 %v2445, 1.0
    %v2458 = vadd.f32 %v2447, 1.0
    %v2459 = vadd.f32 %v2449, 1.0
    %v2460 = vadd.f32 %v2451, 1.0
    %v2461 = vadd.f32 %v2453, 1.0
    %v2462 = vrcp.pop %v2454
    %v2463 = vmul.f32 %v2454, %v2462
    %v2464 = vsub.f32 1.0, %v2463
    %v2465 = vmul.f32 %v2462, %v2464
    %v2466 = vadd.f32 %v2462, %v2465
    %vm2467 = vweird.f32 %v2454
    %vm2468 = vweird.f32 %v2462
    %vm2469 = vmor %vm2467, %vm2468
    %v2470 = vsel %vm2469, %v2462, %v2466
    %v2471 = vand.u32 2147483647, %v2454
    %vm2472 = vcmp.eq.f32.partialorder %v2471, 8.507059e+37
    %v2473 = vand.u32 %v2454, 2147483648
    %v2474 = vor.u32 1.1754944e-38, %v2473
    %v2475 = vsel %vm2472, %v2474, %v2470
    %v2476 = vmul.f32 1.0, %v2475
    %v2477 = vrcp.pop %v2455
    %v2478 = vmul.f32 %v2455, %v2477
    %v2479 = vsub.f32 1.0, %v2478
    %v2480 = vmul.f32 %v2477, %v2479
    %v2481 = vadd.f32 %v2477, %v2480
    %vm2482 = vweird.f32 %v2455
    %vm2483 = vweird.f32 %v2477
    %vm2484 = vmor %vm2482, %vm2483
    %v2485 = vsel %vm2484, %v2477, %v2481
    %v2486 = vand.u32 2147483647, %v2455
    %vm2487 = vcmp.eq.f32.partialorder %v2486, 8.507059e+37
    %v2488 = vand.u32 %v2455, 2147483648
    %v2489 = vor.u32 1.1754944e-38, %v2488
    %v2490 = vsel %vm2487, %v2489, %v2485
    %v2491 = vmul.f32 1.0, %v2490
    %v2492 = vrcp.pop %v2456
    %v2493 = vmul.f32 %v2456, %v2492
    %v2494 = vsub.f32 1.0, %v2493
    %v2495 = vmul.f32 %v2492, %v2494
    %v2496 = vadd.f32 %v2492, %v2495
    %vm2497 = vweird.f32 %v2456
    %vm2498 = vweird.f32 %v2492
    %vm2499 = vmor %vm2497, %vm2498
    %v2500 = vsel %vm2499, %v2492, %v2496
    %v2501 = vand.u32 2147483647, %v2456
    %vm2502 = vcmp.eq.f32.partialorder %v2501, 8.507059e+37
    %v2503 = vand.u32 %v2456, 2147483648
    %v2504 = vor.u32 1.1754944e-38, %v2503
    %v2505 = vsel %vm2502, %v2504, %v2500
    %v2506 = vmul.f32 1.0, %v2505
    %v2507 = vrcp.pop %v2457
    %v2508 = vmul.f32 %v2457, %v2507
    %v2509 = vsub.f32 1.0, %v2508
    %v2510 = vmul.f32 %v2507, %v2509
    %v2511 = vadd.f32 %v2507, %v2510
    %vm2512 = vweird.f32 %v2457
    %vm2513 = vweird.f32 %v2507
    %vm2514 = vmor %vm2512, %vm2513
    %v2515 = vsel %vm2514, %v2507, %v2511
    %v2516 = vand.u32 2147483647, %v2457
    %vm2517 = vcmp.eq.f32.partialorder %v2516, 8.507059e+37
    %v2518 = vand.u32 %v2457, 2147483648
    %v2519 = vor.u32 1.1754944e-38, %v2518
    %v2520 = vsel %vm2517, %v2519, %v2515
    %v2521 = vmul.f32 1.0, %v2520
    %v2522 = vrcp.pop %v2458
    %v2523 = vmul.f32 %v2458, %v2522
    %v2524 = vsub.f32 1.0, %v2523
    %v2525 = vmul.f32 %v2522, %v2524
    %v2526 = vadd.f32 %v2522, %v2525
    %vm2527 = vweird.f32 %v2458
    %vm2528 = vweird.f32 %v2522
    %vm2529 = vmor %vm2527, %vm2528
    %v2530 = vsel %vm2529, %v2522, %v2526
    %v2531 = vand.u32 2147483647, %v2458
    %vm2532 = vcmp.eq.f32.partialorder %v2531, 8.507059e+37
    %v2533 = vand.u32 %v2458, 2147483648
    %v2534 = vor.u32 1.1754944e-38, %v2533
    %v2535 = vsel %vm2532, %v2534, %v2530
    %v2536 = vmul.f32 1.0, %v2535
    %v2537 = vrcp.pop %v2459
    %v2538 = vmul.f32 %v2459, %v2537
    %v2539 = vsub.f32 1.0, %v2538
    %v2540 = vmul.f32 %v2537, %v2539
    %v2541 = vadd.f32 %v2537, %v2540
    %vm2542 = vweird.f32 %v2459
    %vm2543 = vweird.f32 %v2537
    %vm2544 = vmor %vm2542, %vm2543
    %v2545 = vsel %vm2544, %v2537, %v2541
    %v2546 = vand.u32 2147483647, %v2459
    %vm2547 = vcmp.eq.f32.partialorder %v2546, 8.507059e+37
    %v2548 = vand.u32 %v2459, 2147483648
    %v2549 = vor.u32 1.1754944e-38, %v2548
    %v2550 = vsel %vm2547, %v2549, %v2545
    %v2551 = vmul.f32 1.0, %v2550
    %v2552 = vrcp.pop %v2460
    %v2553 = vmul.f32 %v2460, %v2552
    %v2554 = vsub.f32 1.0, %v2553
    %v2555 = vmul.f32 %v2552, %v2554
    %v2556 = vadd.f32 %v2552, %v2555
    %vm2557 = vweird.f32 %v2460
    %vm2558 = vweird.f32 %v2552
    %vm2559 = vmor %vm2557, %vm2558
    %v2560 = vsel %vm2559, %v2552, %v2556
    %v2561 = vand.u32 2147483647, %v2460
    %vm2562 = vcmp.eq.f32.partialorder %v2561, 8.507059e+37
    %v2563 = vand.u32 %v2460, 2147483648
    %v2564 = vor.u32 1.1754944e-38, %v2563
    %v2565 = vsel %vm2562, %v2564, %v2560
    %v2566 = vmul.f32 1.0, %v2565
    %v2567 = vrcp.pop %v2461
    %v2568 = vmul.f32 %v2461, %v2567
    %v2569 = vsub.f32 1.0, %v2568
    %v2570 = vmul.f32 %v2567, %v2569
    %v2571 = vadd.f32 %v2567, %v2570
    %vm2572 = vweird.f32 %v2461
    %vm2573 = vweird.f32 %v2567
    %vm2574 = vmor %vm2572, %vm2573
    %v2575 = vsel %vm2574, %v2567, %v2571
    %v2576 = vand.u32 2147483647, %v2461
    %vm2577 = vcmp.eq.f32.partialorder %v2576, 8.507059e+37
    %v2578 = vand.u32 %v2461, 2147483648
    %v2579 = vor.u32 1.1754944e-38, %v2578
    %v2580 = vsel %vm2577, %v2579, %v2575
    %v2581 = vmul.f32 1.0, %v2580
    %v2590 = vrot.slane %v2491, 6
    %v2591 = vrot.slane %v2506, 4
    %v2592 = vrot.slane %v2521, 2
    %v2593 = vrot.slane %v2551, 6
    %v2594 = vrot.slane %v2566, 4
    %v2595 = vrot.slane %v2581, 2
    %v2596 = vsel %vm1330, %v2476, %v2590
    %vm2597 = vcmask 1045508
    %v2598 = vsel %vm2597, %v2591, %v2592
    %vm2599 = vcmask 1043456
    %v2600 = vsel %vm2599, %v2596, %v2598
    %v2601 = vsel %vm1330, %v2536, %v2593
    %v2602 = vsel %vm2597, %v2594, %v2595
    %v2603 = vsel %vm2599, %v2601, %v2602
    %2606 = vst [vmem:[#allocation7] sm:$0xff] %v2600
    %2607 = vst [vmem:[#allocation7 + $0x8] sm:$0xff] %v2603
    // Predicated region
    $region62: #{tpu_custom_call.1} parent=1 // pred_check
      _
    $region63: #{tpu_custom_call.1} parent=1 // pred_check_branch
      %2609 = sbr.rel (0) target = $region65
    $region64: #{tpu_custom_call.1} parent=1 // pred_region
      %2611 = vsyncadd [#allocation4], 0
      %s2613 = sshll.u32 [#allocation7], 4
      %s2614 = int_to_ptr.vmem [resolvable:$true] %s2613
      %s2615 = sshll.u32 %s13, 4
      %s2616 = int_to_ptr.hbm [resolvable:$true] %s2615
      %2618 = dma.vmem_to_hbm [thread:$0]  %s2614, 256, %s2616, [#allocation4]
    $region65: #{tpu_custom_call.1} parent=1 // pred_fallthru
      _
    // Predicated region
    $region66: #{tpu_custom_call.1} parent=1 // pred_check
      _
    $region67: #{tpu_custom_call.1} parent=1 // pred_check_branch
      %2620 = sbr.rel (0) target = $region69
    $region68: #{tpu_custom_call.1} parent=1 // pred_region
      %2622 = dma.done [#allocation4], 256
    $region69: #{tpu_custom_call.1} parent=1 // pred_fallthru
      _
    %2623 = vsyncpa [#allocation3], 1
    %2624 = vsyncpa [#allocation6], 1
    %2625 = vsyncpa [#allocation4], 1

</llo_original>
